<compile_context>
chip_gen: v6e
topology: v6e:2x2x1
jax: 0.10.0
libtpu: 0.0.40
codegen_flags: <defaults>
</compile_context>

<pallas_src>
import math

import jax
import jax.numpy as jnp
from jax.experimental import pallas as pl
from jax.experimental.pallas import tpu as pltpu

LEAKY_SLOPE = 0.01   # torch.nn.LeakyReLU default
BN_EPS = 1e-5        # torch.nn.BatchNorm1d default


# ----------------------------------------------------------------------------
# static architecture plan (mirrors the PyTorch __init__ thresholds)
# ----------------------------------------------------------------------------
def make_layer_plan(features_in_dim, frame_width_in):
    conv_defs = [
        (features_in_dim, 64, 3),
        (64, 128, 3),
        (128, 256, 3),
        (256, 256, 3),
        (256, 128, 1),
    ]
    pool_after = [
        frame_width_in > 10,
        frame_width_in > 21,
        frame_width_in > 43,
        frame_width_in > 87,
        False,
    ]
    plan = []
    length = frame_width_in
    for (cin, cout, k), pool in zip(conv_defs, pool_after):
        plan.append(dict(cin=cin, cout=cout, k=k, l_in=length, pool=bool(pool)))
        if pool:
            length = length // 2          # MaxPool1d(2) floors odd lengths
    return plan, length


# ----------------------------------------------------------------------------
# fused encoder kernel
# ----------------------------------------------------------------------------
def make_encoder(features_in_dim, frame_width_in, latent_dim, batch):
    plan, l_final = make_layer_plan(features_in_dim, frame_width_in)
    n_layers = len(plan)
    feat = l_final * 128

    # VMEM scratch: one zero-padded input buffer per K=3 conv and one buffer per
    # maxpool (needed for the strided even/odd row reads).  Batch is on the grid,
    # so every scratch is batch-1 sized.
    scratch_shapes = []
    pad_slot, pool_slot = [], []
    for layer in plan:
        if layer["k"] == 3:
            pad_slot.append(len(scratch_shapes))
            scratch_shapes.append(
                pltpu.VMEM((1, layer["l_in"] + 2, layer["cin"]), jnp.float32))
        else:
            pad_slot.append(None)
        if layer["pool"]:
            pool_slot.append(len(scratch_shapes))
            scratch_shapes.append(
                pltpu.VMEM((1, layer["l_in"], layer["cout"]), jnp.float32))
        else:
            pool_slot.append(None)

    def kernel(*refs):
        x_ref = refs[0]
        conv_refs = refs[1:1 + 3 * n_layers]
        lw_ref = refs[1 + 3 * n_layers]
        lb_ref = refs[2 + 3 * n_layers]
        o_ref = refs[3 + 3 * n_layers]
        scratch = refs[4 + 3 * n_layers:]

        h = x_ref[...]                                   # (1, L0, Cin), channels last

        for li, layer in enumerate(plan):
            w_ref = conv_refs[3 * li]                    # (K*Cin, Cout) im2col weight
            s_ref = conv_refs[3 * li + 1]                # (1, Cout) folded BN scale
            b_ref = conv_refs[3 * li + 2]                # (1, Cout) folded BN + conv bias
            L, cin, cout, k = layer["l_in"], layer["cin"], layer["cout"], layer["k"]

            if k == 3:
                # In-kernel zero padding along L, then im2col -> ONE matmul
                # with contraction 3*Cin and M = L rows.
                pad_ref = scratch[pad_slot[li]]
                zrow = jnp.zeros((1, 1, cin), jnp.float32)
                pad_ref[:, 0:1, :] = zrow
                pad_ref[:, L + 1:L + 2, :] = zrow
                pad_ref[:, 1:L + 1, :] = h
                xp = pad_ref[...]                        # (1, L+2, Cin)
                cols = jnp.concatenate(
                    [xp[:, 0:L, :], xp[:, 1:L + 1, :], xp[:, 2:L + 2, :]], axis=2)
                mat = cols.reshape(L, 3 * cin)
            else:                                        # k == 1 pointwise conv
                mat = h.reshape(L, cin)

            y = jnp.dot(mat, w_ref[...], preferred_element_type=jnp.float32)
            y = y * s_ref[...] + b_ref[...]              # folded BatchNorm (+ conv bias)
            y = jnp.where(y > 0, y, LEAKY_SLOPE * y)     # LeakyReLU
            h = y.reshape(1, L, cout)

            if layer["pool"]:                            # MaxPool1d(kernel=2, stride=2)
                pool_ref = scratch[pool_slot[li]]
                pool_ref[...] = h
                lp = L // 2
                even = pool_ref[:, pl.ds(0, lp, stride=2), :]
                odd = pool_ref[:, pl.ds(1, lp, stride=2), :]
                h = jnp.maximum(even, odd)               # (1, L//2, Cout); floors odd L

        # Flatten + Linear + tanh.  lin_w rows were pre-permuted to the
        # (l-major, c-minor) order of our channels-last layout, so the flatten is a
        # lane-concat — no transpose, and the projection is a single matmul.
        act = h.reshape(l_final, 128)
        flat = jnp.concatenate([act[l:l + 1, :] for l in range(l_final)], axis=1)
        out = jnp.dot(flat, lw_ref[...], preferred_element_type=jnp.float32) + lb_ref[...]
        # TODO(synk): config.final_activation_fn assumed to be tanh.
        o_ref[...] = jnp.tanh(out).reshape(1, 1, latent_dim)

    # BlockSpecs: input/output split over the batch grid axis; weights are whole-array
    # VMEM-resident blocks (constant index map -> fetched once).
    in_specs = [pl.BlockSpec((1, frame_width_in, features_in_dim), lambda i: (i, 0, 0))]
    for layer in plan:
        kc = layer["k"] * layer["cin"]
        in_specs.append(pl.BlockSpec((kc, layer["cout"]), lambda i: (0, 0)))
        in_specs.append(pl.BlockSpec((1, layer["cout"]), lambda i: (0, 0)))
        in_specs.append(pl.BlockSpec((1, layer["cout"]), lambda i: (0, 0)))
    in_specs.append(pl.BlockSpec((feat, latent_dim), lambda i: (0, 0)))
    in_specs.append(pl.BlockSpec((1, latent_dim), lambda i: (0, 0)))

    fused_call = pl.pallas_call(
        kernel,
        out_shape=jax.ShapeDtypeStruct((batch, 1, latent_dim), jnp.float32),
        grid=(batch,),
        in_specs=in_specs,
        out_specs=pl.BlockSpec((1, 1, latent_dim), lambda i: (i, 0, 0)),
        scratch_shapes=scratch_shapes,
        compiler_params=pltpu.CompilerParams(
            dimension_semantics=("parallel",)),   # batch sharded over v7x's 2 TCs
    )

    def forward(data_ncl, kparams):
        # (N, C_in, L) -> channels-last (N, L, C_in): single tiny transpose at entry.
        x = jnp.transpose(data_ncl, (0, 2, 1)).astype(jnp.float32)
        args = [x]
        for blk in kparams["blocks"]:
            args += [blk["w"], blk["scale"], blk["bias"]]
        args += [kparams["lin_w"], kparams["lin_b"]]
        out = fused_call(*args)
        return out.reshape(batch, latent_dim)

    return jax.jit(forward), plan, l_final


# ----------------------------------------------------------------------------
# synthetic parameters (PyTorch layout) and conversion to kernel layout
# ----------------------------------------------------------------------------
def make_torch_params(key, plan, l_final, latent_dim):
    keys = jax.random.split(key, 6 * len(plan) + 2)
    ki = 0
    convs = []
    for layer in plan:
        cin, cout, k = layer["cin"], layer["cout"], layer["k"]
        w = jax.random.normal(keys[ki], (cout, cin, k), jnp.float32) / math.sqrt(cin * k); ki += 1
        b = 0.05 * jax.random.normal(keys[ki], (cout,), jnp.float32); ki += 1
        gamma = 1.0 + 0.1 * jax.random.normal(keys[ki], (cout,), jnp.float32); ki += 1
        beta = 0.05 * jax.random.normal(keys[ki], (cout,), jnp.float32); ki += 1
        mean = 0.1 * jax.random.normal(keys[ki], (cout,), jnp.float32); ki += 1
        var = 1.0 + 0.1 * jax.random.uniform(keys[ki], (cout,), jnp.float32); ki += 1
        convs.append(dict(w=w, b=b, gamma=gamma, beta=beta, mean=mean, var=var))
    feat = l_final * 128
    lw = jax.random.normal(keys[ki], (latent_dim, feat), jnp.float32) / math.sqrt(feat); ki += 1
    lb = 0.05 * jax.random.normal(keys[ki], (latent_dim,), jnp.float32)
    return dict(convs=convs, lin_w=lw, lin_b=lb)


def to_kernel_params(tparams, plan, l_final, latent_dim):
    blocks = []
    for layer, c in zip(plan, tparams["convs"]):
        k, cin, cout = layer["k"], layer["cin"], layer["cout"]
        # torch (Cout, Cin, K) -> im2col (K*Cin, Cout) with row index t*Cin + c.
        w_im2col = jnp.transpose(c["w"], (2, 1, 0)).reshape(k * cin, cout)
        scale = c["gamma"] / jnp.sqrt(c["var"] + BN_EPS)
        bias = c["beta"] + (c["b"] - c["mean"]) * scale
        blocks.append(dict(w=w_im2col.astype(jnp.float32),
                           scale=scale.reshape(1, cout).astype(jnp.float32),
                           bias=bias.reshape(1, cout).astype(jnp.float32)))
    # torch Linear weight (D, 128*l_final) with flatten index c*l_final + l
    # -> permuted (l_final*128, D) with row index l*128 + c (our flatten order).
    lw = tparams["lin_w"]
    lw_perm = jnp.transpose(lw.reshape(latent_dim, 128, l_final), (2, 1, 0))
    lw_perm = lw_perm.reshape(l_final * 128, latent_dim)
    lin_b = tparams["lin_b"].reshape(1, latent_dim)
    return dict(blocks=blocks,
                lin_w=lw_perm.astype(jnp.float32),
                lin_b=lin_b.astype(jnp.float32))


# ----------------------------------------------------------------------------
# pure-JAX reference in the original PyTorch layout (for a correctness check)
# ----------------------------------------------------------------------------
def reference_forward(data_ncl, tparams, plan):
    hi = jax.lax.Precision.HIGHEST
    x = data_ncl
    for layer, c in zip(plan, tparams["convs"]):
        k = layer["k"]
        pad = (k - 1) // 2
        L = x.shape[2]
        xp = jnp.pad(x, ((0, 0), (0, 0), (pad, pad)))
        y = c["b"][None, :, None]
        for t in range(k):
            y = y + jnp.einsum("ncl,oc->nol", xp[:, :, t:t + L], c["w"][:, :, t],
                               precision=hi)
        y = (y - c["mean"][None, :, None]) / jnp.sqrt(c["var"] + BN_EPS)[None, :, None]
        y = y * c["gamma"][None, :, None] + c["beta"][None, :, None]
        y = jnp.where(y > 0, y, LEAKY_SLOPE * y)
        if layer["pool"]:
            Lc = y.shape[2] // 2
            y = jnp.max(y[:, :, :2 * Lc].reshape(y.shape[0], y.shape[1], Lc, 2), axis=3)
        x = y
    flat = x.reshape(x.shape[0], -1)                     # torch Flatten: (N, C*L)
    out = jnp.dot(flat, tparams["lin_w"].T, precision=hi) + tparams["lin_b"][None, :]
    return jnp.tanh(out)


# ----------------------------------------------------------------------------
if __name__ == "__main__":
    # EncoderConfig: features_in_dim=4, frame_width_in=16, latent_dim=32,
    # final_activation_fn=tanh  ->  one MaxPool (only 16 > 10 fires).
    FEATURES_IN, FRAME_WIDTH, LATENT, BATCH = 4, 16, 32, 2

    forward, plan, l_final = make_encoder(FEATURES_IN, FRAME_WIDTH, LATENT, BATCH)

    key = jax.random.PRNGKey(0)
    k_data, k_params = jax.random.split(key)
    data = jax.random.normal(k_data, (BATCH, FEATURES_IN, FRAME_WIDTH), jnp.float32)

    torch_params = make_torch_params(k_params, plan, l_final, LATENT)
    kparams = to_kernel_params(torch_params, plan, l_final, LATENT)

    out = forward(data, kparams)
    out = jax.block_until_ready(out)
    assert out.shape == (BATCH, LATENT), out.shape
    assert bool(jnp.all(jnp.isfinite(out)))

    ref = reference_forward(data, torch_params, plan)
    max_err = float(jnp.max(jnp.abs(out - ref)))
    assert max_err < 3e-2, f"mismatch vs reference: {max_err}"

    print("KERNEL_OK")
</pallas_src>

<mosaic_0001>
module attributes {stable_mosaic.version = 11 : i64} {
  func.func @kernel(%arg0: i32, %arg1: memref<1x16x4xf32, #tpu.memory_space<vmem>>, %arg2: memref<12x64xf32, #tpu.memory_space<vmem>>, %arg3: memref<1x64xf32, #tpu.memory_space<vmem>>, %arg4: memref<1x64xf32, #tpu.memory_space<vmem>>, %arg5: memref<192x128xf32, #tpu.memory_space<vmem>>, %arg6: memref<1x128xf32, #tpu.memory_space<vmem>>, %arg7: memref<1x128xf32, #tpu.memory_space<vmem>>, %arg8: memref<384x256xf32, #tpu.memory_space<vmem>>, %arg9: memref<1x256xf32, #tpu.memory_space<vmem>>, %arg10: memref<1x256xf32, #tpu.memory_space<vmem>>, %arg11: memref<768x256xf32, #tpu.memory_space<vmem>>, %arg12: memref<1x256xf32, #tpu.memory_space<vmem>>, %arg13: memref<1x256xf32, #tpu.memory_space<vmem>>, %arg14: memref<256x128xf32, #tpu.memory_space<vmem>>, %arg15: memref<1x128xf32, #tpu.memory_space<vmem>>, %arg16: memref<1x128xf32, #tpu.memory_space<vmem>>, %arg17: memref<1024x32xf32, #tpu.memory_space<vmem>>, %arg18: memref<1x32xf32, #tpu.memory_space<vmem>>, %arg19: memref<1x1x32xf32, #tpu.memory_space<vmem>>, %arg20: memref<1x18x4xf32, #tpu.memory_space<vmem>>, %arg21: memref<1x16x64xf32, #tpu.memory_space<vmem>>, %arg22: memref<1x10x64xf32, #tpu.memory_space<vmem>>, %arg23: memref<1x10x128xf32, #tpu.memory_space<vmem>>, %arg24: memref<1x10x256xf32, #tpu.memory_space<vmem>>) attributes {dimension_semantics = [#tpu.dimension_semantics<parallel>], iteration_bounds = array<i64: 2>, scalar_prefetch = 0 : i64, scratch_operands = 5 : i64, tpu.core_type = #tpu.core_type<tc>, window_params = [{transform_indices = @transform_0, window_bounds = array<i64: 1, 16, 4>}, {pipeline_mode = #tpu.pipeline_mode<synchronous>, transform_indices = @transform_1, window_bounds = array<i64: 12, 64>}, {pipeline_mode = #tpu.pipeline_mode<synchronous>, transform_indices = @transform_2, window_bounds = array<i64: 1, 64>}, {pipeline_mode = #tpu.pipeline_mode<synchronous>, transform_indices = @transform_3, window_bounds = array<i64: 1, 64>}, {pipeline_mode = #tpu.pipeline_mode<synchronous>, transform_indices = @transform_4, window_bounds = array<i64: 192, 128>}, {pipeline_mode = #tpu.pipeline_mode<synchronous>, transform_indices = @transform_5, window_bounds = array<i64: 1, 128>}, {pipeline_mode = #tpu.pipeline_mode<synchronous>, transform_indices = @transform_6, window_bounds = array<i64: 1, 128>}, {pipeline_mode = #tpu.pipeline_mode<synchronous>, transform_indices = @transform_7, window_bounds = array<i64: 384, 256>}, {pipeline_mode = #tpu.pipeline_mode<synchronous>, transform_indices = @transform_8, window_bounds = array<i64: 1, 256>}, {pipeline_mode = #tpu.pipeline_mode<synchronous>, transform_indices = @transform_9, window_bounds = array<i64: 1, 256>}, {pipeline_mode = #tpu.pipeline_mode<synchronous>, transform_indices = @transform_10, window_bounds = array<i64: 768, 256>}, {pipeline_mode = #tpu.pipeline_mode<synchronous>, transform_indices = @transform_11, window_bounds = array<i64: 1, 256>}, {pipeline_mode = #tpu.pipeline_mode<synchronous>, transform_indices = @transform_12, window_bounds = array<i64: 1, 256>}, {pipeline_mode = #tpu.pipeline_mode<synchronous>, transform_indices = @transform_13, window_bounds = array<i64: 256, 128>}, {pipeline_mode = #tpu.pipeline_mode<synchronous>, transform_indices = @transform_14, window_bounds = array<i64: 1, 128>}, {pipeline_mode = #tpu.pipeline_mode<synchronous>, transform_indices = @transform_15, window_bounds = array<i64: 1, 128>}, {pipeline_mode = #tpu.pipeline_mode<synchronous>, transform_indices = @transform_16, window_bounds = array<i64: 1024, 32>}, {pipeline_mode = #tpu.pipeline_mode<synchronous>, transform_indices = @transform_17, window_bounds = array<i64: 1, 32>}, {transform_indices = @transform_18, window_bounds = array<i64: 1, 1, 32>}]} {
    %c0 = arith.constant 0 : index
    %c0_0 = arith.constant 0 : index
    %c0_1 = arith.constant 0 : index
    %0 = vector.load %arg1[%c0, %c0_0, %c0_1] : memref<1x16x4xf32, #tpu.memory_space<vmem>>, vector<1x16x4xf32>
    %cst = arith.constant 0.000000e+00 : f32
    %1 = vector.broadcast %cst : f32 to vector<1x1x4xf32>
    %c0_2 = arith.constant 0 : index
    %c0_3 = arith.constant 0 : index
    %c0_4 = arith.constant 0 : index
    %2 = vector.load %arg20[%c0_2, %c0_3, %c0_4] : memref<1x18x4xf32, #tpu.memory_space<vmem>>, vector<1x1x4xf32>
    tpu.vector_store %arg20[%c0_2, %c0_3, %c0_4], %1 {strides = array<i32>} : memref<1x18x4xf32, #tpu.memory_space<vmem>>, vector<1x1x4xf32>,
    %c0_5 = arith.constant 0 : index
    %c17 = arith.constant 17 : index
    %c0_6 = arith.constant 0 : index
    %3 = vector.load %arg20[%c0_5, %c17, %c0_6] : memref<1x18x4xf32, #tpu.memory_space<vmem>>, vector<1x1x4xf32>
    tpu.vector_store %arg20[%c0_5, %c17, %c0_6], %1 {strides = array<i32>} : memref<1x18x4xf32, #tpu.memory_space<vmem>>, vector<1x1x4xf32>,
    %c0_7 = arith.constant 0 : index
    %c1 = arith.constant 1 : index
    %c0_8 = arith.constant 0 : index
    %4 = vector.load %arg20[%c0_7, %c1, %c0_8] : memref<1x18x4xf32, #tpu.memory_space<vmem>>, vector<1x16x4xf32>
    tpu.vector_store %arg20[%c0_7, %c1, %c0_8], %0 {strides = array<i32>} : memref<1x18x4xf32, #tpu.memory_space<vmem>>, vector<1x16x4xf32>,
    %c0_9 = arith.constant 0 : index
    %c0_10 = arith.constant 0 : index
    %c0_11 = arith.constant 0 : index
    %5 = vector.load %arg20[%c0_9, %c0_10, %c0_11] : memref<1x18x4xf32, #tpu.memory_space<vmem>>, vector<1x18x4xf32>
    %6 = vector.extract_strided_slice %5 {offsets = [0, 0, 0], sizes = [1, 16, 4], strides = [1, 1, 1]} : vector<1x18x4xf32> to vector<1x16x4xf32>
    %7 = vector.extract_strided_slice %5 {offsets = [0, 1, 0], sizes = [1, 16, 4], strides = [1, 1, 1]} : vector<1x18x4xf32> to vector<1x16x4xf32>
    %8 = vector.extract_strided_slice %5 {offsets = [0, 2, 0], sizes = [1, 16, 4], strides = [1, 1, 1]} : vector<1x18x4xf32> to vector<1x16x4xf32>
    %9 = tpu.concatenate %6, %7, %8 in 2 : vector<1x16x4xf32>, vector<1x16x4xf32>, vector<1x16x4xf32> -> vector<1x16x12xf32>
    %10 = vector.shape_cast %9 : vector<1x16x12xf32> to vector<16x12xf32>
    %c0_12 = arith.constant 0 : index
    %c0_13 = arith.constant 0 : index
    %11 = vector.load %arg2[%c0_12, %c0_13] : memref<12x64xf32, #tpu.memory_space<vmem>>, vector<12x64xf32>
    %cst_14 = arith.constant dense<0.000000e+00> : vector<16x64xf32>
    %12 = tpu.matmul %10, %11, %cst_14 {dimension_numbers = #tpu.dot_dimension_numbers<[1], [0], [0], [1], [0, 0, 1, 1], [], []>} : vector<16x12xf32>, vector<12x64xf32>, vector<16x64xf32> -> vector<16x64xf32>
    %c0_15 = arith.constant 0 : index
    %c0_16 = arith.constant 0 : index
    %13 = vector.load %arg3[%c0_15, %c0_16] : memref<1x64xf32, #tpu.memory_space<vmem>>, vector<1x64xf32>
    %14 = vector.broadcast %13 : vector<1x64xf32> to vector<16x64xf32>
    %15 = arith.mulf %12, %14 : vector<16x64xf32>
    %c0_17 = arith.constant 0 : index
    %c0_18 = arith.constant 0 : index
    %16 = vector.load %arg4[%c0_17, %c0_18] : memref<1x64xf32, #tpu.memory_space<vmem>>, vector<1x64xf32>
    %17 = vector.broadcast %16 : vector<1x64xf32> to vector<16x64xf32>
    %18 = arith.addf %15, %17 : vector<16x64xf32>
    %cst_19 = arith.constant 0.000000e+00 : f32
    %19 = vector.broadcast %cst_19 : f32 to vector<16x64xf32>
    %20 = arith.cmpf ogt, %18, %19 : vector<16x64xf32>
    %cst_20 = arith.constant 0.00999999977 : f32
    %21 = vector.broadcast %cst_20 : f32 to vector<16x64xf32>
    %22 = arith.mulf %21, %18 : vector<16x64xf32>
    %23 = arith.select %20, %18, %22 : vector<16x64xi1>, vector<16x64xf32>
    %24 = vector.shape_cast %23 : vector<16x64xf32> to vector<1x16x64xf32>
    %c0_21 = arith.constant 0 : index
    %c0_22 = arith.constant 0 : index
    %c0_23 = arith.constant 0 : index
    %25 = vector.load %arg21[%c0_21, %c0_22, %c0_23] : memref<1x16x64xf32, #tpu.memory_space<vmem>>, vector<1x16x64xf32>
    tpu.vector_store %arg21[%c0_21, %c0_22, %c0_23], %24 {strides = array<i32>} : memref<1x16x64xf32, #tpu.memory_space<vmem>>, vector<1x16x64xf32>,
    %c0_24 = arith.constant 0 : index
    %c0_25 = arith.constant 0 : index
    %c0_26 = arith.constant 0 : index
    %26 = tpu.strided_load %arg21[%c0_24, %c0_25, %c0_26] {strides = array<i32: 1, 2, 1>} : memref<1x16x64xf32, #tpu.memory_space<vmem>>, vector<1x8x64xf32>
    %c0_27 = arith.constant 0 : index
    %c1_28 = arith.constant 1 : index
    %c0_29 = arith.constant 0 : index
    %27 = tpu.strided_load %arg21[%c0_27, %c1_28, %c0_29] {strides = array<i32: 1, 2, 1>} : memref<1x16x64xf32, #tpu.memory_space<vmem>>, vector<1x8x64xf32>
    %28 = arith.maximumf %26, %27 : vector<1x8x64xf32>
    %cst_30 = arith.constant 0.000000e+00 : f32
    %29 = vector.broadcast %cst_30 : f32 to vector<1x1x64xf32>
    %c0_31 = arith.constant 0 : index
    %c0_32 = arith.constant 0 : index
    %c0_33 = arith.constant 0 : index
    %30 = vector.load %arg22[%c0_31, %c0_32, %c0_33] : memref<1x10x64xf32, #tpu.memory_space<vmem>>, vector<1x1x64xf32>
    tpu.vector_store %arg22[%c0_31, %c0_32, %c0_33], %29 {strides = array<i32>} : memref<1x10x64xf32, #tpu.memory_space<vmem>>, vector<1x1x64xf32>,
    %c0_34 = arith.constant 0 : index
    %c9 = arith.constant 9 : index
    %c0_35 = arith.constant 0 : index
    %31 = vector.load %arg22[%c0_34, %c9, %c0_35] : memref<1x10x64xf32, #tpu.memory_space<vmem>>, vector<1x1x64xf32>
    tpu.vector_store %arg22[%c0_34, %c9, %c0_35], %29 {strides = array<i32>} : memref<1x10x64xf32, #tpu.memory_space<vmem>>, vector<1x1x64xf32>,
    %c0_36 = arith.constant 0 : index
    %c1_37 = arith.constant 1 : index
    %c0_38 = arith.constant 0 : index
    %32 = vector.load %arg22[%c0_36, %c1_37, %c0_38] : memref<1x10x64xf32, #tpu.memory_space<vmem>>, vector<1x8x64xf32>
    tpu.vector_store %arg22[%c0_36, %c1_37, %c0_38], %28 {strides = array<i32>} : memref<1x10x64xf32, #tpu.memory_space<vmem>>, vector<1x8x64xf32>,
    %c0_39 = arith.constant 0 : index
    %c0_40 = arith.constant 0 : index
    %c0_41 = arith.constant 0 : index
    %33 = vector.load %arg22[%c0_39, %c0_40, %c0_41] : memref<1x10x64xf32, #tpu.memory_space<vmem>>, vector<1x10x64xf32>
    %34 = vector.extract_strided_slice %33 {offsets = [0, 0, 0], sizes = [1, 8, 64], strides = [1, 1, 1]} : vector<1x10x64xf32> to vector<1x8x64xf32>
    %35 = vector.extract_strided_slice %33 {offsets = [0, 1, 0], sizes = [1, 8, 64], strides = [1, 1, 1]} : vector<1x10x64xf32> to vector<1x8x64xf32>
    %36 = vector.extract_strided_slice %33 {offsets = [0, 2, 0], sizes = [1, 8, 64], strides = [1, 1, 1]} : vector<1x10x64xf32> to vector<1x8x64xf32>
    %37 = tpu.concatenate %34, %35, %36 in 2 : vector<1x8x64xf32>, vector<1x8x64xf32>, vector<1x8x64xf32> -> vector<1x8x192xf32>
    %38 = vector.shape_cast %37 : vector<1x8x192xf32> to vector<8x192xf32>
    %c0_42 = arith.constant 0 : index
    %c0_43 = arith.constant 0 : index
    %39 = vector.load %arg5[%c0_42, %c0_43] : memref<192x128xf32, #tpu.memory_space<vmem>>, vector<192x128xf32>
    %cst_44 = arith.constant dense<0.000000e+00> : vector<8x128xf32>
    %40 = tpu.matmul %38, %39, %cst_44 {dimension_numbers = #tpu.dot_dimension_numbers<[1], [0], [0], [1], [0, 0, 1, 1], [], []>} : vector<8x192xf32>, vector<192x128xf32>, vector<8x128xf32> -> vector<8x128xf32>
    %c0_45 = arith.constant 0 : index
    %c0_46 = arith.constant 0 : index
    %41 = vector.load %arg6[%c0_45, %c0_46] : memref<1x128xf32, #tpu.memory_space<vmem>>, vector<1x128xf32>
    %42 = vector.broadcast %41 : vector<1x128xf32> to vector<8x128xf32>
    %43 = arith.mulf %40, %42 : vector<8x128xf32>
    %c0_47 = arith.constant 0 : index
    %c0_48 = arith.constant 0 : index
    %44 = vector.load %arg7[%c0_47, %c0_48] : memref<1x128xf32, #tpu.memory_space<vmem>>, vector<1x128xf32>
    %45 = vector.broadcast %44 : vector<1x128xf32> to vector<8x128xf32>
    %46 = arith.addf %43, %45 : vector<8x128xf32>
    %cst_49 = arith.constant 0.000000e+00 : f32
    %47 = vector.broadcast %cst_49 : f32 to vector<8x128xf32>
    %48 = arith.cmpf ogt, %46, %47 : vector<8x128xf32>
    %cst_50 = arith.constant 0.00999999977 : f32
    %49 = vector.broadcast %cst_50 : f32 to vector<8x128xf32>
    %50 = arith.mulf %49, %46 : vector<8x128xf32>
    %51 = arith.select %48, %46, %50 : vector<8x128xi1>, vector<8x128xf32>
    %52 = vector.shape_cast %51 : vector<8x128xf32> to vector<1x8x128xf32>
    %cst_51 = arith.constant 0.000000e+00 : f32
    %53 = vector.broadcast %cst_51 : f32 to vector<1x1x128xf32>
    %c0_52 = arith.constant 0 : index
    %c0_53 = arith.constant 0 : index
    %c0_54 = arith.constant 0 : index
    %54 = vector.load %arg23[%c0_52, %c0_53, %c0_54] : memref<1x10x128xf32, #tpu.memory_space<vmem>>, vector<1x1x128xf32>
    tpu.vector_store %arg23[%c0_52, %c0_53, %c0_54], %53 {strides = array<i32>} : memref<1x10x128xf32, #tpu.memory_space<vmem>>, vector<1x1x128xf32>,
    %c0_55 = arith.constant 0 : index
    %c9_56 = arith.constant 9 : index
    %c0_57 = arith.constant 0 : index
    %55 = vector.load %arg23[%c0_55, %c9_56, %c0_57] : memref<1x10x128xf32, #tpu.memory_space<vmem>>, vector<1x1x128xf32>
    tpu.vector_store %arg23[%c0_55, %c9_56, %c0_57], %53 {strides = array<i32>} : memref<1x10x128xf32, #tpu.memory_space<vmem>>, vector<1x1x128xf32>,
    %c0_58 = arith.constant 0 : index
    %c1_59 = arith.constant 1 : index
    %c0_60 = arith.constant 0 : index
    %56 = vector.load %arg23[%c0_58, %c1_59, %c0_60] : memref<1x10x128xf32, #tpu.memory_space<vmem>>, vector<1x8x128xf32>
    tpu.vector_store %arg23[%c0_58, %c1_59, %c0_60], %52 {strides = array<i32>} : memref<1x10x128xf32, #tpu.memory_space<vmem>>, vector<1x8x128xf32>,
    %c0_61 = arith.constant 0 : index
    %c0_62 = arith.constant 0 : index
    %c0_63 = arith.constant 0 : index
    %57 = vector.load %arg23[%c0_61, %c0_62, %c0_63] : memref<1x10x128xf32, #tpu.memory_space<vmem>>, vector<1x10x128xf32>
    %58 = vector.extract_strided_slice %57 {offsets = [0, 0, 0], sizes = [1, 8, 128], strides = [1, 1, 1]} : vector<1x10x128xf32> to vector<1x8x128xf32>
    %59 = vector.extract_strided_slice %57 {offsets = [0, 1, 0], sizes = [1, 8, 128], strides = [1, 1, 1]} : vector<1x10x128xf32> to vector<1x8x128xf32>
    %60 = vector.extract_strided_slice %57 {offsets = [0, 2, 0], sizes = [1, 8, 128], strides = [1, 1, 1]} : vector<1x10x128xf32> to vector<1x8x128xf32>
    %61 = tpu.concatenate %58, %59, %60 in 2 : vector<1x8x128xf32>, vector<1x8x128xf32>, vector<1x8x128xf32> -> vector<1x8x384xf32>
    %62 = vector.shape_cast %61 : vector<1x8x384xf32> to vector<8x384xf32>
    %c0_64 = arith.constant 0 : index
    %c0_65 = arith.constant 0 : index
    %63 = vector.load %arg8[%c0_64, %c0_65] : memref<384x256xf32, #tpu.memory_space<vmem>>, vector<384x256xf32>
    %cst_66 = arith.constant dense<0.000000e+00> : vector<8x256xf32>
    %64 = tpu.matmul %62, %63, %cst_66 {dimension_numbers = #tpu.dot_dimension_numbers<[1], [0], [0], [1], [0, 0, 1, 1], [], []>} : vector<8x384xf32>, vector<384x256xf32>, vector<8x256xf32> -> vector<8x256xf32>
    %c0_67 = arith.constant 0 : index
    %c0_68 = arith.constant 0 : index
    %65 = vector.load %arg9[%c0_67, %c0_68] : memref<1x256xf32, #tpu.memory_space<vmem>>, vector<1x256xf32>
    %66 = vector.broadcast %65 : vector<1x256xf32> to vector<8x256xf32>
    %67 = arith.mulf %64, %66 : vector<8x256xf32>
    %c0_69 = arith.constant 0 : index
    %c0_70 = arith.constant 0 : index
    %68 = vector.load %arg10[%c0_69, %c0_70] : memref<1x256xf32, #tpu.memory_space<vmem>>, vector<1x256xf32>
    %69 = vector.broadcast %68 : vector<1x256xf32> to vector<8x256xf32>
    %70 = arith.addf %67, %69 : vector<8x256xf32>
    %cst_71 = arith.constant 0.000000e+00 : f32
    %71 = vector.broadcast %cst_71 : f32 to vector<8x256xf32>
    %72 = arith.cmpf ogt, %70, %71 : vector<8x256xf32>
    %cst_72 = arith.constant 0.00999999977 : f32
    %73 = vector.broadcast %cst_72 : f32 to vector<8x256xf32>
    %74 = arith.mulf %73, %70 : vector<8x256xf32>
    %75 = arith.select %72, %70, %74 : vector<8x256xi1>, vector<8x256xf32>
    %76 = vector.shape_cast %75 : vector<8x256xf32> to vector<1x8x256xf32>
    %cst_73 = arith.constant 0.000000e+00 : f32
    %77 = vector.broadcast %cst_73 : f32 to vector<1x1x256xf32>
    %c0_74 = arith.constant 0 : index
    %c0_75 = arith.constant 0 : index
    %c0_76 = arith.constant 0 : index
    %78 = vector.load %arg24[%c0_74, %c0_75, %c0_76] : memref<1x10x256xf32, #tpu.memory_space<vmem>>, vector<1x1x256xf32>
    tpu.vector_store %arg24[%c0_74, %c0_75, %c0_76], %77 {strides = array<i32>} : memref<1x10x256xf32, #tpu.memory_space<vmem>>, vector<1x1x256xf32>,
    %c0_77 = arith.constant 0 : index
    %c9_78 = arith.constant 9 : index
    %c0_79 = arith.constant 0 : index
    %79 = vector.load %arg24[%c0_77, %c9_78, %c0_79] : memref<1x10x256xf32, #tpu.memory_space<vmem>>, vector<1x1x256xf32>
    tpu.vector_store %arg24[%c0_77, %c9_78, %c0_79], %77 {strides = array<i32>} : memref<1x10x256xf32, #tpu.memory_space<vmem>>, vector<1x1x256xf32>,
    %c0_80 = arith.constant 0 : index
    %c1_81 = arith.constant 1 : index
    %c0_82 = arith.constant 0 : index
    %80 = vector.load %arg24[%c0_80, %c1_81, %c0_82] : memref<1x10x256xf32, #tpu.memory_space<vmem>>, vector<1x8x256xf32>
    tpu.vector_store %arg24[%c0_80, %c1_81, %c0_82], %76 {strides = array<i32>} : memref<1x10x256xf32, #tpu.memory_space<vmem>>, vector<1x8x256xf32>,
    %c0_83 = arith.constant 0 : index
    %c0_84 = arith.constant 0 : index
    %c0_85 = arith.constant 0 : index
    %81 = vector.load %arg24[%c0_83, %c0_84, %c0_85] : memref<1x10x256xf32, #tpu.memory_space<vmem>>, vector<1x10x256xf32>
    %82 = vector.extract_strided_slice %81 {offsets = [0, 0, 0], sizes = [1, 8, 256], strides = [1, 1, 1]} : vector<1x10x256xf32> to vector<1x8x256xf32>
    %83 = vector.extract_strided_slice %81 {offsets = [0, 1, 0], sizes = [1, 8, 256], strides = [1, 1, 1]} : vector<1x10x256xf32> to vector<1x8x256xf32>
    %84 = vector.extract_strided_slice %81 {offsets = [0, 2, 0], sizes = [1, 8, 256], strides = [1, 1, 1]} : vector<1x10x256xf32> to vector<1x8x256xf32>
    %85 = tpu.concatenate %82, %83, %84 in 2 : vector<1x8x256xf32>, vector<1x8x256xf32>, vector<1x8x256xf32> -> vector<1x8x768xf32>
    %86 = vector.shape_cast %85 : vector<1x8x768xf32> to vector<8x768xf32>
    %c0_86 = arith.constant 0 : index
    %c0_87 = arith.constant 0 : index
    %87 = vector.load %arg11[%c0_86, %c0_87] : memref<768x256xf32, #tpu.memory_space<vmem>>, vector<768x256xf32>
    %cst_88 = arith.constant dense<0.000000e+00> : vector<8x256xf32>
    %88 = tpu.matmul %86, %87, %cst_88 {dimension_numbers = #tpu.dot_dimension_numbers<[1], [0], [0], [1], [0, 0, 1, 1], [], []>} : vector<8x768xf32>, vector<768x256xf32>, vector<8x256xf32> -> vector<8x256xf32>
    %c0_89 = arith.constant 0 : index
    %c0_90 = arith.constant 0 : index
    %89 = vector.load %arg12[%c0_89, %c0_90] : memref<1x256xf32, #tpu.memory_space<vmem>>, vector<1x256xf32>
    %90 = vector.broadcast %89 : vector<1x256xf32> to vector<8x256xf32>
    %91 = arith.mulf %88, %90 : vector<8x256xf32>
    %c0_91 = arith.constant 0 : index
    %c0_92 = arith.constant 0 : index
    %92 = vector.load %arg13[%c0_91, %c0_92] : memref<1x256xf32, #tpu.memory_space<vmem>>, vector<1x256xf32>
    %93 = vector.broadcast %92 : vector<1x256xf32> to vector<8x256xf32>
    %94 = arith.addf %91, %93 : vector<8x256xf32>
    %cst_93 = arith.constant 0.000000e+00 : f32
    %95 = vector.broadcast %cst_93 : f32 to vector<8x256xf32>
    %96 = arith.cmpf ogt, %94, %95 : vector<8x256xf32>
    %cst_94 = arith.constant 0.00999999977 : f32
    %97 = vector.broadcast %cst_94 : f32 to vector<8x256xf32>
    %98 = arith.mulf %97, %94 : vector<8x256xf32>
    %99 = arith.select %96, %94, %98 : vector<8x256xi1>, vector<8x256xf32>
    %100 = vector.shape_cast %99 : vector<8x256xf32> to vector<1x8x256xf32>
    %101 = vector.shape_cast %100 : vector<1x8x256xf32> to vector<8x256xf32>
    %c0_95 = arith.constant 0 : index
    %c0_96 = arith.constant 0 : index
    %102 = vector.load %arg14[%c0_95, %c0_96] : memref<256x128xf32, #tpu.memory_space<vmem>>, vector<256x128xf32>
    %cst_97 = arith.constant dense<0.000000e+00> : vector<8x128xf32>
    %103 = tpu.matmul %101, %102, %cst_97 {dimension_numbers = #tpu.dot_dimension_numbers<[1], [0], [0], [1], [0, 0, 1, 1], [], []>} : vector<8x256xf32>, vector<256x128xf32>, vector<8x128xf32> -> vector<8x128xf32>
    %c0_98 = arith.constant 0 : index
    %c0_99 = arith.constant 0 : index
    %104 = vector.load %arg15[%c0_98, %c0_99] : memref<1x128xf32, #tpu.memory_space<vmem>>, vector<1x128xf32>
    %105 = vector.broadcast %104 : vector<1x128xf32> to vector<8x128xf32>
    %106 = arith.mulf %103, %105 : vector<8x128xf32>
    %c0_100 = arith.constant 0 : index
    %c0_101 = arith.constant 0 : index
    %107 = vector.load %arg16[%c0_100, %c0_101] : memref<1x128xf32, #tpu.memory_space<vmem>>, vector<1x128xf32>
    %108 = vector.broadcast %107 : vector<1x128xf32> to vector<8x128xf32>
    %109 = arith.addf %106, %108 : vector<8x128xf32>
    %cst_102 = arith.constant 0.000000e+00 : f32
    %110 = vector.broadcast %cst_102 : f32 to vector<8x128xf32>
    %111 = arith.cmpf ogt, %109, %110 : vector<8x128xf32>
    %cst_103 = arith.constant 0.00999999977 : f32
    %112 = vector.broadcast %cst_103 : f32 to vector<8x128xf32>
    %113 = arith.mulf %112, %109 : vector<8x128xf32>
    %114 = arith.select %111, %109, %113 : vector<8x128xi1>, vector<8x128xf32>
    %115 = vector.shape_cast %114 : vector<8x128xf32> to vector<1x8x128xf32>
    %116 = vector.shape_cast %115 : vector<1x8x128xf32> to vector<8x128xf32>
    %117 = vector.extract_strided_slice %116 {offsets = [0, 0], sizes = [1, 128], strides = [1, 1]} : vector<8x128xf32> to vector<1x128xf32>
    %118 = vector.extract_strided_slice %116 {offsets = [1, 0], sizes = [1, 128], strides = [1, 1]} : vector<8x128xf32> to vector<1x128xf32>
    %119 = vector.extract_strided_slice %116 {offsets = [2, 0], sizes = [1, 128], strides = [1, 1]} : vector<8x128xf32> to vector<1x128xf32>
    %120 = vector.extract_strided_slice %116 {offsets = [3, 0], sizes = [1, 128], strides = [1, 1]} : vector<8x128xf32> to vector<1x128xf32>
    %121 = vector.extract_strided_slice %116 {offsets = [4, 0], sizes = [1, 128], strides = [1, 1]} : vector<8x128xf32> to vector<1x128xf32>
    %122 = vector.extract_strided_slice %116 {offsets = [5, 0], sizes = [1, 128], strides = [1, 1]} : vector<8x128xf32> to vector<1x128xf32>
    %123 = vector.extract_strided_slice %116 {offsets = [6, 0], sizes = [1, 128], strides = [1, 1]} : vector<8x128xf32> to vector<1x128xf32>
    %124 = vector.extract_strided_slice %116 {offsets = [7, 0], sizes = [1, 128], strides = [1, 1]} : vector<8x128xf32> to vector<1x128xf32>
    %125 = tpu.concatenate %117, %118, %119, %120, %121, %122, %123, %124 in 1 : vector<1x128xf32>, vector<1x128xf32>, vector<1x128xf32>, vector<1x128xf32>, vector<1x128xf32>, vector<1x128xf32>, vector<1x128xf32>, vector<1x128xf32> -> vector<1x1024xf32>
    %c0_104 = arith.constant 0 : index
    %c0_105 = arith.constant 0 : index
    %126 = vector.load %arg17[%c0_104, %c0_105] : memref<1024x32xf32, #tpu.memory_space<vmem>>, vector<1024x32xf32>
    %cst_106 = arith.constant dense<0.000000e+00> : vector<1x32xf32>
    %127 = tpu.matmul %125, %126, %cst_106 {dimension_numbers = #tpu.dot_dimension_numbers<[1], [0], [0], [1], [0, 0, 1, 1], [], []>} : vector<1x1024xf32>, vector<1024x32xf32>, vector<1x32xf32> -> vector<1x32xf32>
    %c0_107 = arith.constant 0 : index
    %c0_108 = arith.constant 0 : index
    %128 = vector.load %arg18[%c0_107, %c0_108] : memref<1x32xf32, #tpu.memory_space<vmem>>, vector<1x32xf32>
    %129 = arith.addf %127, %128 : vector<1x32xf32>
    %130 = math.tanh %129 : vector<1x32xf32>
    %131 = vector.shape_cast %130 : vector<1x32xf32> to vector<1x1x32xf32>
    %c0_109 = arith.constant 0 : index
    %c0_110 = arith.constant 0 : index
    %c0_111 = arith.constant 0 : index
    %132 = vector.load %arg19[%c0_109, %c0_110, %c0_111] : memref<1x1x32xf32, #tpu.memory_space<vmem>>, vector<1x1x32xf32>
    tpu.vector_store %arg19[%c0_109, %c0_110, %c0_111], %131 {strides = array<i32>} : memref<1x1x32xf32, #tpu.memory_space<vmem>>, vector<1x1x32xf32>,
    return
  }
  func.func @transform_0(%arg0: i32) -> (i32, i32, i32) {
    %c0_i32 = arith.constant 0 : i32
    %c0_i32_0 = arith.constant 0 : i32
    %c0_i32_1 = arith.constant 0 : i32
    return %arg0, %c0_i32, %c0_i32_0 : i32, i32, i32
  }
  func.func @transform_1(%arg0: i32) -> (i32, i32) {
    %c0_i32 = arith.constant 0 : i32
    %c0_i32_0 = arith.constant 0 : i32
    %c0_i32_1 = arith.constant 0 : i32
    return %c0_i32, %c0_i32_0 : i32, i32
  }
  func.func @transform_2(%arg0: i32) -> (i32, i32) {
    %c0_i32 = arith.constant 0 : i32
    %c0_i32_0 = arith.constant 0 : i32
    %c0_i32_1 = arith.constant 0 : i32
    return %c0_i32, %c0_i32_0 : i32, i32
  }
  func.func @transform_3(%arg0: i32) -> (i32, i32) {
    %c0_i32 = arith.constant 0 : i32
    %c0_i32_0 = arith.constant 0 : i32
    %c0_i32_1 = arith.constant 0 : i32
    return %c0_i32, %c0_i32_0 : i32, i32
  }
  func.func @transform_4(%arg0: i32) -> (i32, i32) {
    %c0_i32 = arith.constant 0 : i32
    %c0_i32_0 = arith.constant 0 : i32
    %c0_i32_1 = arith.constant 0 : i32
    return %c0_i32, %c0_i32_0 : i32, i32
  }
  func.func @transform_5(%arg0: i32) -> (i32, i32) {
    %c0_i32 = arith.constant 0 : i32
    %c0_i32_0 = arith.constant 0 : i32
    %c0_i32_1 = arith.constant 0 : i32
    return %c0_i32, %c0_i32_0 : i32, i32
  }
  func.func @transform_6(%arg0: i32) -> (i32, i32) {
    %c0_i32 = arith.constant 0 : i32
    %c0_i32_0 = arith.constant 0 : i32
    %c0_i32_1 = arith.constant 0 : i32
    return %c0_i32, %c0_i32_0 : i32, i32
  }
  func.func @transform_7(%arg0: i32) -> (i32, i32) {
    %c0_i32 = arith.constant 0 : i32
    %c0_i32_0 = arith.constant 0 : i32
    %c0_i32_1 = arith.constant 0 : i32
    return %c0_i32, %c0_i32_0 : i32, i32
  }
  func.func @transform_8(%arg0: i32) -> (i32, i32) {
    %c0_i32 = arith.constant 0 : i32
    %c0_i32_0 = arith.constant 0 : i32
    %c0_i32_1 = arith.constant 0 : i32
    return %c0_i32, %c0_i32_0 : i32, i32
  }
  func.func @transform_9(%arg0: i32) -> (i32, i32) {
    %c0_i32 = arith.constant 0 : i32
    %c0_i32_0 = arith.constant 0 : i32
    %c0_i32_1 = arith.constant 0 : i32
    return %c0_i32, %c0_i32_0 : i32, i32
  }
  func.func @transform_10(%arg0: i32) -> (i32, i32) {
    %c0_i32 = arith.constant 0 : i32
    %c0_i32_0 = arith.constant 0 : i32
    %c0_i32_1 = arith.constant 0 : i32
    return %c0_i32, %c0_i32_0 : i32, i32
  }
  func.func @transform_11(%arg0: i32) -> (i32, i32) {
    %c0_i32 = arith.constant 0 : i32
    %c0_i32_0 = arith.constant 0 : i32
    %c0_i32_1 = arith.constant 0 : i32
    return %c0_i32, %c0_i32_0 : i32, i32
  }
  func.func @transform_12(%arg0: i32) -> (i32, i32) {
    %c0_i32 = arith.constant 0 : i32
    %c0_i32_0 = arith.constant 0 : i32
    %c0_i32_1 = arith.constant 0 : i32
    return %c0_i32, %c0_i32_0 : i32, i32
  }
  func.func @transform_13(%arg0: i32) -> (i32, i32) {
    %c0_i32 = arith.constant 0 : i32
    %c0_i32_0 = arith.constant 0 : i32
    %c0_i32_1 = arith.constant 0 : i32
    return %c0_i32, %c0_i32_0 : i32, i32
  }
  func.func @transform_14(%arg0: i32) -> (i32, i32) {
    %c0_i32 = arith.constant 0 : i32
    %c0_i32_0 = arith.constant 0 : i32
    %c0_i32_1 = arith.constant 0 : i32
    return %c0_i32, %c0_i32_0 : i32, i32
  }
  func.func @transform_15(%arg0: i32) -> (i32, i32) {
    %c0_i32 = arith.constant 0 : i32
    %c0_i32_0 = arith.constant 0 : i32
    %c0_i32_1 = arith.constant 0 : i32
    return %c0_i32, %c0_i32_0 : i32, i32
  }
  func.func @transform_16(%arg0: i32) -> (i32, i32) {
    %c0_i32 = arith.constant 0 : i32
    %c0_i32_0 = arith.constant 0 : i32
    %c0_i32_1 = arith.constant 0 : i32
    return %c0_i32, %c0_i32_0 : i32, i32
  }
  func.func @transform_17(%arg0: i32) -> (i32, i32) {
    %c0_i32 = arith.constant 0 : i32
    %c0_i32_0 = arith.constant 0 : i32
    %c0_i32_1 = arith.constant 0 : i32
    return %c0_i32, %c0_i32_0 : i32, i32
  }
  func.func @transform_18(%arg0: i32) -> (i32, i32, i32) {
    %c0_i32 = arith.constant 0 : i32
    %c0_i32_0 = arith.constant 0 : i32
    %c0_i32_1 = arith.constant 0 : i32
    return %arg0, %c0_i32, %c0_i32_0 : i32, i32, i32
  }
}

</mosaic_0001>

<llo_original>
// kernel: forward.1
$region0: #{forward.1}
  #allocation0 [shape = 'u32[]', space=smem, size = 0x4, offset = 0x4, fixed_abs, tag = 'smem constant byte address 0x4 - core index']
  #allocation1 [shape = 'u32[144,128]{1,0:T(1,128)}', space=vmem, size = 0x12000, scoped, tag = 'internal scratch']
  #allocation2 [shape = 'f32[1,18,4]{2,1,0:T(8,128)}', space=vmem, size = 0x3000, scoped, tag = 'scratch operand']
  #allocation3 [shape = 'f32[1,16,64]{2,1,0:T(8,128)}', space=vmem, size = 0x2000, scoped, tag = 'scratch operand']
  #allocation4 [shape = 'f32[1,10,64]{2,1,0:T(8,128)}', space=vmem, size = 0x2000, scoped, tag = 'scratch operand']
  #allocation5 [shape = 'f32[1,10,128]{2,1,0:T(8,128)}', space=vmem, size = 0x2000, scoped, tag = 'scratch operand']
  #allocation6 [shape = 'f32[1,10,256]{2,1,0:T(8,128)}', space=vmem, size = 0x4000, scoped, tag = 'scratch operand']
  %s0 = inlined_call_operand.vmem [shape: f32[2,16,4], index: 0, kind: input, shape index: {}]
  %s1 = inlined_call_operand.vmem [shape: f32[12,64], index: 1, kind: input, shape index: {}]
  %s2 = inlined_call_operand.vmem [shape: f32[1,64], index: 2, kind: input, shape index: {}]
  %s3 = inlined_call_operand.vmem [shape: f32[1,64], index: 3, kind: input, shape index: {}]
  %s4 = inlined_call_operand.vmem [shape: f32[192,128], index: 4, kind: input, shape index: {}]
  %s5 = inlined_call_operand.vmem [shape: f32[1,128], index: 5, kind: input, shape index: {}]
  %s6 = inlined_call_operand.vmem [shape: f32[1,128], index: 6, kind: input, shape index: {}]
  %s7 = inlined_call_operand.vmem [shape: f32[384,256], index: 7, kind: input, shape index: {}]
  %s8 = inlined_call_operand.vmem [shape: f32[1,256], index: 8, kind: input, shape index: {}]
  %s9 = inlined_call_operand.vmem [shape: f32[1,256], index: 9, kind: input, shape index: {}]
  %s10 = inlined_call_operand.hbm [shape: f32[768,256], index: 10, kind: input, shape index: {}]
  %s11 = inlined_call_operand.vmem [shape: f32[1,256], index: 11, kind: input, shape index: {}]
  %s12 = inlined_call_operand.vmem [shape: f32[1,256], index: 12, kind: input, shape index: {}]
  %s13 = inlined_call_operand.vmem [shape: f32[256,128], index: 13, kind: input, shape index: {}]
  %s14 = inlined_call_operand.vmem [shape: f32[1,128], index: 14, kind: input, shape index: {}]
  %s15 = inlined_call_operand.vmem [shape: f32[1,128], index: 15, kind: input, shape index: {}]
  %s16 = inlined_call_operand.vmem [shape: f32[1024,32], index: 16, kind: input, shape index: {}]
  %s17 = inlined_call_operand.vmem [shape: f32[1,32], index: 17, kind: input, shape index: {}]
  %s18 = inlined_call_operand.hbm [shape: f32[2,1,32], index: 18, kind: output, shape index: {}]
  %s19 = sld [smem:[#allocation0]]
  $region109: #{forward.1} parent=0
    _
  %s21 = ssub.s32 1, %s19
  %s22 = scalar_select 0, %s21, %s19
  $region1: #{forward.1} parent=0
    #allocation7 [shape = 'u8[786432]{0}', space=vmem, size = 0xc0000, scoped, tag = 'input window, operand 10, single buffered']
    #allocation8 [shape = 's32[2]{0}', space=sflag, size = 0x8, scoped, tag = 'scoped memory for forward.1']
    #allocation9 [shape = 's32[2]{0}', space=sflag, size = 0x8, scoped, tag = 'scoped memory for forward.1']
    #allocation10 [shape = 'u8[1024]{0}', space=vmem, size = 0x400, scoped, tag = 'output window, operand 0']
    %23 = vsyncpa [#allocation8], 0
    %24 = vsyncpa [#allocation9], 0
    %s25 = scalar_lea.sflag [#allocation9], 1
    %26 = vsyncpa %s25, 0
    loop: start=0, step=1, limit=4
    $region2: #{forward.1} parent=1 // loop_pre_header
      _
    $region3: #{forward.1} parent=1 // loop_header
      %s28 = sphi 0, %s32
      %p29 = scmp.ge.s32.totalorder %s28, 4
      %s38 = sphi 0, %s40
      %s41 = sphi 0, %s38
      %s42 = sphi 0, %s41
      %s58 = sphi 0, %s42
      %s62 = sphi 0, %s62
      %s64 = sphi 0, %s62
      %s65 = sphi 0, %s64
      %s79 = sphi 0, %s65
      %s83 = sphi 0, %s83
      %s85 = sphi 0, %s83
      %s86 = sphi 0, %s85
      %s100 = sphi 0, %s86
      %s104 = sphi 0, %s104
      %s106 = sphi 0, %s104
      %s107 = sphi 0, %s106
      %s121 = sphi 0, %s107
      %s125 = sphi 0, %s125
      %s127 = sphi 0, %s125
      %s128 = sphi 0, %s127
      %s142 = sphi 0, %s128
      %s146 = sphi 0, %s146
      %s148 = sphi 0, %s146
      %s149 = sphi 0, %s148
      %s163 = sphi 0, %s149
      %s167 = sphi 0, %s167
      %s169 = sphi 0, %s167
      %s170 = sphi 0, %s169
      %s184 = sphi 0, %s170
      %s188 = sphi 0, %s188
      %s190 = sphi 0, %s188
      %s191 = sphi 0, %s190
      %s205 = sphi 0, %s191
      %s209 = sphi 0, %s209
      %s211 = sphi 0, %s209
      %s212 = sphi 0, %s211
      %s226 = sphi 0, %s212
      %s230 = sphi 0, %s230
      %s232 = sphi 0, %s230
      %s233 = sphi 0, %s232
      %s247 = sphi 0, %s233
      %s251 = sphi 0, %s251
      %s253 = sphi 0, %s251
      %s254 = sphi 0, %s253
      %s268 = sphi 0, %s254
      %s272 = sphi 0, %s272
      %s274 = sphi 0, %s272
      %s275 = sphi 0, %s274
      %s289 = sphi 0, %s275
      %s293 = sphi 0, %s293
      %s295 = sphi 0, %s293
      %s296 = sphi 0, %s295
      %s310 = sphi 0, %s296
      %s314 = sphi 0, %s314
      %s316 = sphi 0, %s314
      %s317 = sphi 0, %s316
      %s331 = sphi 0, %s317
      %s335 = sphi 0, %s335
      %s337 = sphi 0, %s335
      %s338 = sphi 0, %s337
      %s352 = sphi 0, %s338
      %s356 = sphi 0, %s356
      %s358 = sphi 0, %s356
      %s359 = sphi 0, %s358
      %s373 = sphi 0, %s359
      %s377 = sphi 0, %s377
      %s379 = sphi 0, %s377
      %s380 = sphi 0, %s379
      %s394 = sphi 0, %s380
      %s398 = sphi 0, %s398
      %s400 = sphi 0, %s398
      %s401 = sphi 0, %s400
      %s415 = sphi 0, %s401
      %s421 = sphi 0, %s423
      %s424 = sphi 0, %s421
      %s425 = sphi 0, %s424
      %s441 = sphi 0, %s425
    $region4: #{forward.1} parent=1 // loop_header_branch
      %31 = sbr.rel (%p29) target = $region8
    $region5: #{forward.1} parent=1 // loop_body
      %s33 = ssub.s32 %s28, 1
      %s34 = ssub.s32 %s28, 2
      %s35 = sadd.s32 %s28, 1
      %s36 = ssub.s32 %s28, %s35
      %p37 = scmp.eq.s32.totalorder %s36, 0
      %s39 = sadd.s32 %s38, 1
      %s40 = scalar_select %p37, %s38, %s39
      %p43 = pneg %p37
      %p44 = scmp.eq.s32.totalorder %s28, 1
      %p45 = por %p43, %p44
      %p46 = scmp.ne.s32.totalorder %s38, %s41
      %p47 = scmp.eq.s32.totalorder %s28, 0
      %p48 = por %p46, %p47
      %p49 = scmp.ne.s32.totalorder %s38, %s41
      %p50 = scmp.eq.s32.totalorder %s33, 1
      %p51 = por %p49, %p50
      %p52 = scmp.ne.s32.totalorder %s41, %s42
      %p53 = scmp.eq.s32.totalorder %s33, 0
      %p54 = por %p52, %p53
      %p55 = scmp.ne.s32.totalorder %s41, %s42
      %p56 = scmp.eq.s32.totalorder %s34, 1
      %p57 = por %p55, %p56
      %p59 = scmp.ne.s32.totalorder %s42, %s58
      %p60 = scmp.eq.s32.totalorder %s34, 0
      %p61 = por %p59, %p60
      %s63 = sadd.s32 %s62, 1
      %p66 = scmp.eq.s32.totalorder %s28, 1
      %p67 = scmp.ne.s32.totalorder %s62, %s64
      %p68 = scmp.eq.s32.totalorder %s28, 0
      %p69 = por %p67, %p68
      %p70 = scmp.ne.s32.totalorder %s62, %s64
      %p71 = scmp.eq.s32.totalorder %s33, 1
      %p72 = por %p70, %p71
      %p73 = scmp.ne.s32.totalorder %s64, %s65
      %p74 = scmp.eq.s32.totalorder %s33, 0
      %p75 = por %p73, %p74
      %p76 = scmp.ne.s32.totalorder %s64, %s65
      %p77 = scmp.eq.s32.totalorder %s34, 1
      %p78 = por %p76, %p77
      %p80 = scmp.ne.s32.totalorder %s65, %s79
      %p81 = scmp.eq.s32.totalorder %s34, 0
      %p82 = por %p80, %p81
      %s84 = sadd.s32 %s83, 1
      %p87 = scmp.eq.s32.totalorder %s28, 1
      %p88 = scmp.ne.s32.totalorder %s83, %s85
      %p89 = scmp.eq.s32.totalorder %s28, 0
      %p90 = por %p88, %p89
      %p91 = scmp.ne.s32.totalorder %s83, %s85
      %p92 = scmp.eq.s32.totalorder %s33, 1
      %p93 = por %p91, %p92
      %p94 = scmp.ne.s32.totalorder %s85, %s86
      %p95 = scmp.eq.s32.totalorder %s33, 0
      %p96 = por %p94, %p95
      %p97 = scmp.ne.s32.totalorder %s85, %s86
      %p98 = scmp.eq.s32.totalorder %s34, 1
      %p99 = por %p97, %p98
      %p101 = scmp.ne.s32.totalorder %s86, %s100
      %p102 = scmp.eq.s32.totalorder %s34, 0
      %p103 = por %p101, %p102
      %s105 = sadd.s32 %s104, 1
      %p108 = scmp.eq.s32.totalorder %s28, 1
      %p109 = scmp.ne.s32.totalorder %s104, %s106
      %p110 = scmp.eq.s32.totalorder %s28, 0
      %p111 = por %p109, %p110
      %p112 = scmp.ne.s32.totalorder %s104, %s106
      %p113 = scmp.eq.s32.totalorder %s33, 1
      %p114 = por %p112, %p113
      %p115 = scmp.ne.s32.totalorder %s106, %s107
      %p116 = scmp.eq.s32.totalorder %s33, 0
      %p117 = por %p115, %p116
      %p118 = scmp.ne.s32.totalorder %s106, %s107
      %p119 = scmp.eq.s32.totalorder %s34, 1
      %p120 = por %p118, %p119
      %p122 = scmp.ne.s32.totalorder %s107, %s121
      %p123 = scmp.eq.s32.totalorder %s34, 0
      %p124 = por %p122, %p123
      %s126 = sadd.s32 %s125, 1
      %p129 = scmp.eq.s32.totalorder %s28, 1
      %p130 = scmp.ne.s32.totalorder %s125, %s127
      %p131 = scmp.eq.s32.totalorder %s28, 0
      %p132 = por %p130, %p131
      %p133 = scmp.ne.s32.totalorder %s125, %s127
      %p134 = scmp.eq.s32.totalorder %s33, 1
      %p135 = por %p133, %p134
      %p136 = scmp.ne.s32.totalorder %s127, %s128
      %p137 = scmp.eq.s32.totalorder %s33, 0
      %p138 = por %p136, %p137
      %p139 = scmp.ne.s32.totalorder %s127, %s128
      %p140 = scmp.eq.s32.totalorder %s34, 1
      %p141 = por %p139, %p140
      %p143 = scmp.ne.s32.totalorder %s128, %s142
      %p144 = scmp.eq.s32.totalorder %s34, 0
      %p145 = por %p143, %p144
      %s147 = sadd.s32 %s146, 1
      %p150 = scmp.eq.s32.totalorder %s28, 1
      %p151 = scmp.ne.s32.totalorder %s146, %s148
      %p152 = scmp.eq.s32.totalorder %s28, 0
      %p153 = por %p151, %p152
      %p154 = scmp.ne.s32.totalorder %s146, %s148
      %p155 = scmp.eq.s32.totalorder %s33, 1
      %p156 = por %p154, %p155
      %p157 = scmp.ne.s32.totalorder %s148, %s149
      %p158 = scmp.eq.s32.totalorder %s33, 0
      %p159 = por %p157, %p158
      %p160 = scmp.ne.s32.totalorder %s148, %s149
      %p161 = scmp.eq.s32.totalorder %s34, 1
      %p162 = por %p160, %p161
      %p164 = scmp.ne.s32.totalorder %s149, %s163
      %p165 = scmp.eq.s32.totalorder %s34, 0
      %p166 = por %p164, %p165
      %s168 = sadd.s32 %s167, 1
      %p171 = scmp.eq.s32.totalorder %s28, 1
      %p172 = scmp.ne.s32.totalorder %s167, %s169
      %p173 = scmp.eq.s32.totalorder %s28, 0
      %p174 = por %p172, %p173
      %p175 = scmp.ne.s32.totalorder %s167, %s169
      %p176 = scmp.eq.s32.totalorder %s33, 1
      %p177 = por %p175, %p176
      %p178 = scmp.ne.s32.totalorder %s169, %s170
      %p179 = scmp.eq.s32.totalorder %s33, 0
      %p180 = por %p178, %p179
      %p181 = scmp.ne.s32.totalorder %s169, %s170
      %p182 = scmp.eq.s32.totalorder %s34, 1
      %p183 = por %p181, %p182
      %p185 = scmp.ne.s32.totalorder %s170, %s184
      %p186 = scmp.eq.s32.totalorder %s34, 0
      %p187 = por %p185, %p186
      %s189 = sadd.s32 %s188, 1
      %p192 = scmp.eq.s32.totalorder %s28, 1
      %p193 = scmp.ne.s32.totalorder %s188, %s190
      %p194 = scmp.eq.s32.totalorder %s28, 0
      %p195 = por %p193, %p194
      %p196 = scmp.ne.s32.totalorder %s188, %s190
      %p197 = scmp.eq.s32.totalorder %s33, 1
      %p198 = por %p196, %p197
      %p199 = scmp.ne.s32.totalorder %s190, %s191
      %p200 = scmp.eq.s32.totalorder %s33, 0
      %p201 = por %p199, %p200
      %p202 = scmp.ne.s32.totalorder %s190, %s191
      %p203 = scmp.eq.s32.totalorder %s34, 1
      %p204 = por %p202, %p203
      %p206 = scmp.ne.s32.totalorder %s191, %s205
      %p207 = scmp.eq.s32.totalorder %s34, 0
      %p208 = por %p206, %p207
      %s210 = sadd.s32 %s209, 1
      %p213 = scmp.eq.s32.totalorder %s28, 1
      %p214 = scmp.ne.s32.totalorder %s209, %s211
      %p215 = scmp.eq.s32.totalorder %s28, 0
      %p216 = por %p214, %p215
      %p217 = scmp.ne.s32.totalorder %s209, %s211
      %p218 = scmp.eq.s32.totalorder %s33, 1
      %p219 = por %p217, %p218
      %p220 = scmp.ne.s32.totalorder %s211, %s212
      %p221 = scmp.eq.s32.totalorder %s33, 0
      %p222 = por %p220, %p221
      %p223 = scmp.ne.s32.totalorder %s211, %s212
      %p224 = scmp.eq.s32.totalorder %s34, 1
      %p225 = por %p223, %p224
      %p227 = scmp.ne.s32.totalorder %s212, %s226
      %p228 = scmp.eq.s32.totalorder %s34, 0
      %p229 = por %p227, %p228
      %s231 = sadd.s32 %s230, 1
      %p234 = scmp.eq.s32.totalorder %s28, 1
      %p235 = scmp.ne.s32.totalorder %s230, %s232
      %p236 = scmp.eq.s32.totalorder %s28, 0
      %p237 = por %p235, %p236
      %p238 = scmp.ne.s32.totalorder %s230, %s232
      %p239 = scmp.eq.s32.totalorder %s33, 1
      %p240 = por %p238, %p239
      %p241 = scmp.ne.s32.totalorder %s232, %s233
      %p242 = scmp.eq.s32.totalorder %s33, 0
      %p243 = por %p241, %p242
      %p244 = scmp.ne.s32.totalorder %s232, %s233
      %p245 = scmp.eq.s32.totalorder %s34, 1
      %p246 = por %p244, %p245
      %p248 = scmp.ne.s32.totalorder %s233, %s247
      %p249 = scmp.eq.s32.totalorder %s34, 0
      %p250 = por %p248, %p249
      %s252 = sadd.s32 %s251, 1
      %p255 = scmp.eq.s32.totalorder %s28, 1
      %p256 = scmp.ne.s32.totalorder %s251, %s253
      %p257 = scmp.eq.s32.totalorder %s28, 0
      %p258 = por %p256, %p257
      %p259 = scmp.ne.s32.totalorder %s251, %s253
      %p260 = scmp.eq.s32.totalorder %s33, 1
      %p261 = por %p259, %p260
      %p262 = scmp.ne.s32.totalorder %s253, %s254
      %p263 = scmp.eq.s32.totalorder %s33, 0
      %p264 = por %p262, %p263
      %p265 = scmp.ne.s32.totalorder %s253, %s254
      %p266 = scmp.eq.s32.totalorder %s34, 1
      %p267 = por %p265, %p266
      %p269 = scmp.ne.s32.totalorder %s254, %s268
      %p270 = scmp.eq.s32.totalorder %s34, 0
      %p271 = por %p269, %p270
      %s273 = sadd.s32 %s272, 1
      %p276 = scmp.eq.s32.totalorder %s28, 1
      %p277 = scmp.ne.s32.totalorder %s272, %s274
      %p278 = scmp.eq.s32.totalorder %s28, 0
      %p279 = por %p277, %p278
      %p280 = scmp.ne.s32.totalorder %s272, %s274
      %p281 = scmp.eq.s32.totalorder %s33, 1
      %p282 = por %p280, %p281
      %p283 = scmp.ne.s32.totalorder %s274, %s275
      %p284 = scmp.eq.s32.totalorder %s33, 0
      %p285 = por %p283, %p284
      %p286 = scmp.ne.s32.totalorder %s274, %s275
      %p287 = scmp.eq.s32.totalorder %s34, 1
      %p288 = por %p286, %p287
      %p290 = scmp.ne.s32.totalorder %s275, %s289
      %p291 = scmp.eq.s32.totalorder %s34, 0
      %p292 = por %p290, %p291
      %s294 = sadd.s32 %s293, 1
      %p297 = scmp.eq.s32.totalorder %s28, 1
      %p298 = scmp.ne.s32.totalorder %s293, %s295
      %p299 = scmp.eq.s32.totalorder %s28, 0
      %p300 = por %p298, %p299
      %p301 = scmp.ne.s32.totalorder %s293, %s295
      %p302 = scmp.eq.s32.totalorder %s33, 1
      %p303 = por %p301, %p302
      %p304 = scmp.ne.s32.totalorder %s295, %s296
      %p305 = scmp.eq.s32.totalorder %s33, 0
      %p306 = por %p304, %p305
      %p307 = scmp.ne.s32.totalorder %s295, %s296
      %p308 = scmp.eq.s32.totalorder %s34, 1
      %p309 = por %p307, %p308
      %p311 = scmp.ne.s32.totalorder %s296, %s310
      %p312 = scmp.eq.s32.totalorder %s34, 0
      %p313 = por %p311, %p312
      %s315 = sadd.s32 %s314, 1
      %p318 = scmp.eq.s32.totalorder %s28, 1
      %p319 = scmp.ne.s32.totalorder %s314, %s316
      %p320 = scmp.eq.s32.totalorder %s28, 0
      %p321 = por %p319, %p320
      %p322 = scmp.ne.s32.totalorder %s314, %s316
      %p323 = scmp.eq.s32.totalorder %s33, 1
      %p324 = por %p322, %p323
      %p325 = scmp.ne.s32.totalorder %s316, %s317
      %p326 = scmp.eq.s32.totalorder %s33, 0
      %p327 = por %p325, %p326
      %p328 = scmp.ne.s32.totalorder %s316, %s317
      %p329 = scmp.eq.s32.totalorder %s34, 1
      %p330 = por %p328, %p329
      %p332 = scmp.ne.s32.totalorder %s317, %s331
      %p333 = scmp.eq.s32.totalorder %s34, 0
      %p334 = por %p332, %p333
      %s336 = sadd.s32 %s335, 1
      %p339 = scmp.eq.s32.totalorder %s28, 1
      %p340 = scmp.ne.s32.totalorder %s335, %s337
      %p341 = scmp.eq.s32.totalorder %s28, 0
      %p342 = por %p340, %p341
      %p343 = scmp.ne.s32.totalorder %s335, %s337
      %p344 = scmp.eq.s32.totalorder %s33, 1
      %p345 = por %p343, %p344
      %p346 = scmp.ne.s32.totalorder %s337, %s338
      %p347 = scmp.eq.s32.totalorder %s33, 0
      %p348 = por %p346, %p347
      %p349 = scmp.ne.s32.totalorder %s337, %s338
      %p350 = scmp.eq.s32.totalorder %s34, 1
      %p351 = por %p349, %p350
      %p353 = scmp.ne.s32.totalorder %s338, %s352
      %p354 = scmp.eq.s32.totalorder %s34, 0
      %p355 = por %p353, %p354
      %s357 = sadd.s32 %s356, 1
      %p360 = scmp.eq.s32.totalorder %s28, 1
      %p361 = scmp.ne.s32.totalorder %s356, %s358
      %p362 = scmp.eq.s32.totalorder %s28, 0
      %p363 = por %p361, %p362
      %p364 = scmp.ne.s32.totalorder %s356, %s358
      %p365 = scmp.eq.s32.totalorder %s33, 1
      %p366 = por %p364, %p365
      %p367 = scmp.ne.s32.totalorder %s358, %s359
      %p368 = scmp.eq.s32.totalorder %s33, 0
      %p369 = por %p367, %p368
      %p370 = scmp.ne.s32.totalorder %s358, %s359
      %p371 = scmp.eq.s32.totalorder %s34, 1
      %p372 = por %p370, %p371
      %p374 = scmp.ne.s32.totalorder %s359, %s373
      %p375 = scmp.eq.s32.totalorder %s34, 0
      %p376 = por %p374, %p375
      %s378 = sadd.s32 %s377, 1
      %p381 = scmp.eq.s32.totalorder %s28, 1
      %p382 = scmp.ne.s32.totalorder %s377, %s379
      %p383 = scmp.eq.s32.totalorder %s28, 0
      %p384 = por %p382, %p383
      %p385 = scmp.ne.s32.totalorder %s377, %s379
      %p386 = scmp.eq.s32.totalorder %s33, 1
      %p387 = por %p385, %p386
      %p388 = scmp.ne.s32.totalorder %s379, %s380
      %p389 = scmp.eq.s32.totalorder %s33, 0
      %p390 = por %p388, %p389
      %p391 = scmp.ne.s32.totalorder %s379, %s380
      %p392 = scmp.eq.s32.totalorder %s34, 1
      %p393 = por %p391, %p392
      %p395 = scmp.ne.s32.totalorder %s380, %s394
      %p396 = scmp.eq.s32.totalorder %s34, 0
      %p397 = por %p395, %p396
      %s399 = sadd.s32 %s398, 1
      %p402 = scmp.eq.s32.totalorder %s28, 1
      %p403 = scmp.ne.s32.totalorder %s398, %s400
      %p404 = scmp.eq.s32.totalorder %s28, 0
      %p405 = por %p403, %p404
      %p406 = scmp.ne.s32.totalorder %s398, %s400
      %p407 = scmp.eq.s32.totalorder %s33, 1
      %p408 = por %p406, %p407
      %p409 = scmp.ne.s32.totalorder %s400, %s401
      %p410 = scmp.eq.s32.totalorder %s33, 0
      %p411 = por %p409, %p410
      %p412 = scmp.ne.s32.totalorder %s400, %s401
      %p413 = scmp.eq.s32.totalorder %s34, 1
      %p414 = por %p412, %p413
      %p416 = scmp.ne.s32.totalorder %s401, %s415
      %p417 = scmp.eq.s32.totalorder %s34, 0
      %p418 = por %p416, %p417
      %s419 = ssub.s32 %s28, %s35
      %p420 = scmp.eq.s32.totalorder %s419, 0
      %s422 = sadd.s32 %s421, 1
      %s423 = scalar_select %p420, %s421, %s422
      %p426 = pneg %p420
      %p427 = scmp.eq.s32.totalorder %s28, 1
      %p428 = por %p426, %p427
      %p429 = scmp.ne.s32.totalorder %s421, %s424
      %p430 = scmp.eq.s32.totalorder %s28, 0
      %p431 = por %p429, %p430
      %p432 = scmp.ne.s32.totalorder %s421, %s424
      %p433 = scmp.eq.s32.totalorder %s33, 1
      %p434 = por %p432, %p433
      %p435 = scmp.ne.s32.totalorder %s424, %s425
      %p436 = scmp.eq.s32.totalorder %s33, 0
      %p437 = por %p435, %p436
      %p438 = scmp.ne.s32.totalorder %s424, %s425
      %p439 = scmp.eq.s32.totalorder %s34, 1
      %p440 = por %p438, %p439
      %p442 = scmp.ne.s32.totalorder %s425, %s441
      %p443 = scmp.eq.s32.totalorder %s34, 0
      %p444 = por %p442, %p443
      %p445 = scmp.le.s32.totalorder 1, %s28
      %p446 = scmp.lt.s32.totalorder %s28, 3
      %p447 = pnand %p445, %p446
      %p448 = pneg %p447
      // Predicated region
      $region9: #{forward.1} parent=5 // pred_check
        _
      $region10: #{forward.1} parent=5 // pred_check_branch
        %450 = sbr.rel (%p447) target = $region12
      $region11: #{forward.1} parent=5 // pred_region
        %s451 = ssub.s32 %s28, 1
        // Predicated region
        $region13: #{forward.1} parent=11 // pred_check
          %p452 = pneg %p75
        $region14: #{forward.1} parent=11 // pred_check_branch
          %454 = sbr.rel (%p452) target = $region16
        $region15: #{forward.1} parent=11 // pred_region
          _
        $region16: #{forward.1} parent=11 // pred_fallthru
          _
        // Predicated region
        $region17: #{forward.1} parent=11 // pred_check
          %p455 = pneg %p96
        $region18: #{forward.1} parent=11 // pred_check_branch
          %457 = sbr.rel (%p455) target = $region20
        $region19: #{forward.1} parent=11 // pred_region
          _
        $region20: #{forward.1} parent=11 // pred_fallthru
          _
        // Predicated region
        $region21: #{forward.1} parent=11 // pred_check
          %p458 = pneg %p117
        $region22: #{forward.1} parent=11 // pred_check_branch
          %460 = sbr.rel (%p458) target = $region24
        $region23: #{forward.1} parent=11 // pred_region
          _
        $region24: #{forward.1} parent=11 // pred_fallthru
          _
        // Predicated region
        $region25: #{forward.1} parent=11 // pred_check
          %p461 = pneg %p138
        $region26: #{forward.1} parent=11 // pred_check_branch
          %463 = sbr.rel (%p461) target = $region28
        $region27: #{forward.1} parent=11 // pred_region
          _
        $region28: #{forward.1} parent=11 // pred_fallthru
          _
        // Predicated region
        $region29: #{forward.1} parent=11 // pred_check
          %p464 = pneg %p159
        $region30: #{forward.1} parent=11 // pred_check_branch
          %466 = sbr.rel (%p464) target = $region32
        $region31: #{forward.1} parent=11 // pred_region
          _
        $region32: #{forward.1} parent=11 // pred_fallthru
          _
        // Predicated region
        $region33: #{forward.1} parent=11 // pred_check
          %p467 = pneg %p180
        $region34: #{forward.1} parent=11 // pred_check_branch
          %469 = sbr.rel (%p467) target = $region36
        $region35: #{forward.1} parent=11 // pred_region
          _
        $region36: #{forward.1} parent=11 // pred_fallthru
          _
        // Predicated region
        $region37: #{forward.1} parent=11 // pred_check
          %p470 = pneg %p201
        $region38: #{forward.1} parent=11 // pred_check_branch
          %472 = sbr.rel (%p470) target = $region40
        $region39: #{forward.1} parent=11 // pred_region
          _
        $region40: #{forward.1} parent=11 // pred_fallthru
          _
        // Predicated region
        $region41: #{forward.1} parent=11 // pred_check
          %p473 = pneg %p222
        $region42: #{forward.1} parent=11 // pred_check_branch
          %475 = sbr.rel (%p473) target = $region44
        $region43: #{forward.1} parent=11 // pred_region
          _
        $region44: #{forward.1} parent=11 // pred_fallthru
          _
        // Predicated region
        $region45: #{forward.1} parent=11 // pred_check
          %p476 = pneg %p243
        $region46: #{forward.1} parent=11 // pred_check_branch
          %478 = sbr.rel (%p476) target = $region48
        $region47: #{forward.1} parent=11 // pred_region
          _
        $region48: #{forward.1} parent=11 // pred_fallthru
          _
        // Predicated region
        $region49: #{forward.1} parent=11 // pred_check
          %p479 = pneg %p264
        $region50: #{forward.1} parent=11 // pred_check_branch
          %481 = sbr.rel (%p479) target = $region52
        $region51: #{forward.1} parent=11 // pred_region
          %s483 = ssub.s32 24576, 24576
          %484 = vsyncadd [#allocation8], %s483
          %s485 = sshll.u32 [#allocation7], 4
          %s486 = int_to_ptr.vmem [resolvable:$true] %s485
          %491 = dma.hbm_to_vmem [thread:$0]  %s10, 24576, %s486, [#allocation8], 256, 256, 16
        $region52: #{forward.1} parent=11 // pred_fallthru
          _
        // Predicated region
        $region53: #{forward.1} parent=11 // pred_check
          %p492 = pneg %p285
        $region54: #{forward.1} parent=11 // pred_check_branch
          %494 = sbr.rel (%p492) target = $region56
        $region55: #{forward.1} parent=11 // pred_region
          _
        $region56: #{forward.1} parent=11 // pred_fallthru
          _
        // Predicated region
        $region57: #{forward.1} parent=11 // pred_check
          %p495 = pneg %p306
        $region58: #{forward.1} parent=11 // pred_check_branch
          %497 = sbr.rel (%p495) target = $region60
        $region59: #{forward.1} parent=11 // pred_region
          _
        $region60: #{forward.1} parent=11 // pred_fallthru
          _
        // Predicated region
        $region61: #{forward.1} parent=11 // pred_check
          %p498 = pneg %p327
        $region62: #{forward.1} parent=11 // pred_check_branch
          %500 = sbr.rel (%p498) target = $region64
        $region63: #{forward.1} parent=11 // pred_region
          _
        $region64: #{forward.1} parent=11 // pred_fallthru
          _
        // Predicated region
        $region65: #{forward.1} parent=11 // pred_check
          %p501 = pneg %p348
        $region66: #{forward.1} parent=11 // pred_check_branch
          %503 = sbr.rel (%p501) target = $region68
        $region67: #{forward.1} parent=11 // pred_region
          _
        $region68: #{forward.1} parent=11 // pred_fallthru
          _
        // Predicated region
        $region69: #{forward.1} parent=11 // pred_check
          %p504 = pneg %p369
        $region70: #{forward.1} parent=11 // pred_check_branch
          %506 = sbr.rel (%p504) target = $region72
        $region71: #{forward.1} parent=11 // pred_region
          _
        $region72: #{forward.1} parent=11 // pred_fallthru
          _
        // Predicated region
        $region73: #{forward.1} parent=11 // pred_check
          %p507 = pneg %p390
        $region74: #{forward.1} parent=11 // pred_check_branch
          %509 = sbr.rel (%p507) target = $region76
        $region75: #{forward.1} parent=11 // pred_region
          _
        $region76: #{forward.1} parent=11 // pred_fallthru
          _
        // Predicated region
        $region77: #{forward.1} parent=11 // pred_check
          %p510 = pneg %p411
        $region78: #{forward.1} parent=11 // pred_check_branch
          %512 = sbr.rel (%p510) target = $region80
        $region79: #{forward.1} parent=11 // pred_region
          _
        $region80: #{forward.1} parent=11 // pred_fallthru
          _
      $region12: #{forward.1} parent=5 // pred_fallthru
        _
      %p513 = scmp.lt.s32.totalorder %s28, 2
      // Predicated region
      $region81: #{forward.1} parent=5 // pred_check
        %p514 = pneg %p513
      $region82: #{forward.1} parent=5 // pred_check_branch
        %516 = sbr.rel (%p514) target = $region84
      $region83: #{forward.1} parent=5 // pred_region
        // Predicated region
        $region85: #{forward.1} parent=83 // pred_check
          %p517 = pneg %p48
        $region86: #{forward.1} parent=83 // pred_check_branch
          %519 = sbr.rel (%p517) target = $region88
        $region87: #{forward.1} parent=83 // pred_region
          %p520 = scmp.lt.s32.totalorder %s28, 1
          %s521 = scalar_select %p520, %s28, 1
          %s522 = smul.addr %s521, 2
          %s523 = smul.addr %s522, 8
          %s524 = scalar_lea.vmem %s0, %s523
        $region88: #{forward.1} parent=83 // pred_fallthru
          _
      $region84: #{forward.1} parent=5 // pred_fallthru
        _
      %p525 = scmp.le.s32.totalorder 1, %s28
      %p526 = scmp.lt.s32.totalorder %s28, 3
      %p527 = pnand %p525, %p526
      %p528 = pneg %p527
      // Predicated region
      $region89: #{forward.1} parent=5 // pred_check
        _
      $region90: #{forward.1} parent=5 // pred_check_branch
        %530 = sbr.rel (%p527) target = $region92
      $region91: #{forward.1} parent=5 // pred_region
        %s531 = ssub.s32 %s28, 1
        // Predicated region
        $region93: #{forward.1} parent=91 // pred_check
          %p532 = pneg %p264
        $region94: #{forward.1} parent=91 // pred_check_branch
          %534 = sbr.rel (%p532) target = $region96
        $region95: #{forward.1} parent=91 // pred_region
          %535 = dma.done [#allocation8], 24576
        $region96: #{forward.1} parent=91 // pred_fallthru
          _
        %p536 = scmp.lt.s32.totalorder %s33, 1
        %s537 = scalar_select %p536, %s33, 1
        %s538 = smul.addr %s537, 2
        %s539 = smul.addr %s538, 8
        %s540 = scalar_lea.vmem %s0, %s539
        %p541 = pneg %p54
        %p542 = pneg %p51
        %p543 = pneg %p75
        %p544 = pneg %p72
        %p545 = pneg %p96
        %p546 = pneg %p93
        %p547 = pneg %p117
        %p548 = pneg %p114
        %p549 = pneg %p138
        %p550 = pneg %p135
        %p551 = pneg %p159
        %p552 = pneg %p156
        %p553 = pneg %p180
        %p554 = pneg %p177
        %p555 = pneg %p201
        %p556 = pneg %p198
        %p557 = pneg %p222
        %p558 = pneg %p219
        %p559 = pneg %p243
        %p560 = pneg %p240
        %p561 = pneg %p264
        %p562 = pneg %p261
        %p563 = pneg %p285
        %p564 = pneg %p282
        %p565 = pneg %p306
        %p566 = pneg %p303
        %p567 = pneg %p327
        %p568 = pneg %p324
        %p569 = pneg %p348
        %p570 = pneg %p345
        %p571 = pneg %p369
        %p572 = pneg %p366
        %p573 = pneg %p390
        %p574 = pneg %p387
        %p575 = pneg %p411
        %p576 = pneg %p408
        %p577 = pneg %p437
        %p578 = pneg %p434
        %s579 = sand.u32 %s424, 1
        %s580 = scalar_lea.sflag [#allocation9], %s579
        %s581 = sand.u32 %s424, 1
        %s582 = scalar_lea.vmem [#allocation10], %s581
        %p583 = scmp.lt.s32.totalorder %s33, 1
        %s584 = scalar_select %p583, %s33, 1
        %s585 = smul.addr %s584, 2
        %s586 = smul.addr %s585, 8
        %s587 = scalar_lea.vmem %s0, %s586
        %v588 = vld [vmem:[%s587] sm:$0xff]
        %v589 = vld [vmem:[%s587 + $0x8] sm:$0xff]
        %vm590 = vcmask 24576
        %591 = vst.msk [vmem:[#allocation2] sm:$0x1] %vm590, 0.0
        %592 = vst.msk [vmem:[#allocation2 + $0x11] sm:$0x1] %vm590, 0.0
        %vm593 = vcmask 31744
        %594 = vst.msk [vmem:[#allocation2 + $0x1] sm:$0xff] %vm593, %v588
        %595 = vst.msk [vmem:[#allocation2 + $0x9] sm:$0xff] %vm593, %v589
        %v596 = vld [vmem:[#allocation2] sm:$0xff]
        %v597 = vld [vmem:[#allocation2 + $0x8] sm:$0xff]
        %v598 = vld [vmem:[#allocation2 + $0x10] sm:$0x3]
        %vm602 = vcmask 1046528
        %v603 = vrot.slane %v596, 1
        %v604 = vrot.slane %v597, 1
        %v605 = vsel %vm602, %v603, %v604
        %v606 = vrot.slane %v598, 1
        %v607 = vsel %vm602, %v604, %v606
        %608 = vrot.lane.b32.xlu0 %v605, 4
        %v609 = vpop.permute.xlu0 %608
        %610 = vrot.lane.b32.xlu0 %v607, 4
        %v611 = vpop.permute.xlu0 %610
        %vm614 = vcmask 1045504
        %v615 = vrot.slane %v596, 2
        %v616 = vrot.slane %v597, 2
        %v617 = vsel %vm614, %v615, %v616
        %v618 = vrot.slane %v598, 2
        %v619 = vsel %vm614, %v616, %v618
        %620 = vrot.lane.b32.xlu0 %v617, 8
        %v621 = vpop.permute.xlu0 %620
        %622 = vrot.lane.b32.xlu0 %v619, 8
        %v623 = vpop.permute.xlu0 %622
        %v626 = vsel %vm593, %v596, %v609
        %v627 = vsel %vm593, %v597, %v611
        %vm628 = vcmask 64512
        %v629 = vsel %vm628, %v626, %v621
        %v630 = vsel %vm628, %v627, %v623
        %v631 = vld [vmem:[%s1] sm:$0xff]
        %v632 = vld [vmem:[%s1 + $0x8] sm:$0xf]
        %vm633 = vcmask 97280
        %v635 = vsel %vm633, %v629, 0
        %v638 = vsel %vm633, %v630, 0
        %vm640 = vcmask 1043456
        %v642 = vsel %vm640, %v632, 0
        %644 = vmatprep.subr.mxu0 0.0
        %645 = vmatpush1.msra.mxu0 0.0
        %646 = vmatprep.subr.mxu0 0.0
        %647 = vmatpush1.msra.mxu0 0.0
        %648 = vmatprep.subr.mxu0 0.0
        %649 = vmatpush1.msra.mxu0 0.0
        %650 = vmatprep.subr.mxu0 0.0
        %651 = vmatpush1.msra.mxu0 0.0
        %652 = vmatprep.subr.mxu0 0.0
        %653 = vmatpush1.msra.mxu0 0.0
        %654 = vmatprep.subr.mxu0 0.0
        %655 = vmatpush1.msra.mxu0 0.0
        %656 = vmatprep.subr.mxu0 0.0
        %657 = vmatpush1.msra.mxu0 0.0
        %658 = vmatprep.subr.mxu0 0.0
        %659 = vmatpush1.msra.mxu0 0.0
        %660 = vmatprep.subr.mxu0 0.0
        %661 = vmatpush1.msra.mxu0 0.0
        %662 = vmatprep.subr.mxu0 0.0
        %663 = vmatpush1.msra.mxu0 0.0
        %664 = vmatprep.subr.mxu0 0.0
        %665 = vmatpush1.msra.mxu0 0.0
        %666 = vmatprep.subr.mxu0 0.0
        %667 = vmatpush1.msra.mxu0 0.0
        %668 = vmatprep.subr.mxu0 0.0
        %669 = vmatpush1.msra.mxu0 0.0
        %670 = vmatprep.subr.mxu0 0.0
        %671 = vmatpush1.msra.mxu0 0.0
        %672 = vmatprep.subr.mxu0 0.0
        %673 = vmatpush1.msra.mxu0 %v642
        %674 = vmatprep.subr.mxu0 0.0
        %675 = vmatpush1.msra.mxu0 %v631
        %676 = vmatprep.subr.mxu0 0.0
        %677 = vmatpush2.msra.mxu0 0.0
        %678 = vmatprep.subr.mxu0 0.0
        %679 = vmatpush2.msra.mxu0 0.0
        %680 = vmatprep.subr.mxu0 0.0
        %681 = vmatpush2.msra.mxu0 0.0
        %682 = vmatprep.subr.mxu0 0.0
        %683 = vmatpush2.msra.mxu0 0.0
        %684 = vmatprep.subr.mxu0 0.0
        %685 = vmatpush2.msra.mxu0 0.0
        %686 = vmatprep.subr.mxu0 0.0
        %687 = vmatpush2.msra.mxu0 0.0
        %688 = vmatprep.subr.mxu0 0.0
        %689 = vmatpush2.msra.mxu0 0.0
        %690 = vmatprep.subr.mxu0 0.0
        %691 = vmatpush2.msra.mxu0 0.0
        %692 = vmatprep.subr.mxu0 0.0
        %693 = vmatpush2.msra.mxu0 0.0
        %694 = vmatprep.subr.mxu0 0.0
        %695 = vmatpush2.msra.mxu0 0.0
        %696 = vmatprep.subr.mxu0 0.0
        %697 = vmatpush2.msra.mxu0 0.0
        %698 = vmatprep.subr.mxu0 0.0
        %699 = vmatpush2.msra.mxu0 0.0
        %700 = vmatprep.subr.mxu0 0.0
        %701 = vmatpush2.msra.mxu0 0.0
        %702 = vmatprep.subr.mxu0 0.0
        %703 = vmatpush2.msra.mxu0 0.0
        %704 = vmatprep.subr.mxu0 0.0
        %705 = vmatpush2.msra.mxu0 0.0
        %706 = vmatprep.subr.mxu0 0.0
        %707 = vmatpush2.msra.mxu0 0.0
        %708 = vmatprep.mubr.f32.mxu0 0.0
        %709 = vmatmul.mubr.f32.gmra.mxu0 %v635
        %v710 = vpop.f32.mrf.mxu0
        %v711 = vadd.f32 0.0, %v710
        %v712 = vpop.f32.mrf.mxu0
        %713 = vmatprep.mubr.f32.mxu0 0.0
        %714 = vmatmul.mubr.f32.gmra.mxu0 %v638
        %v715 = vpop.f32.mrf.mxu0
        %v716 = vadd.f32 0.0, %v715
        %v717 = vpop.f32.mrf.mxu0
        %718 = vdwg.mxu0
        %v719 = vld [vmem:[%s2] sm:$0x1]
        %v721 = vlaneseq
        %v722 = vshrl.u32 %v721, 7
        %v723 = vsub.s32 0, %v722
        %v724 = vrot.slane %v719, %v723
        %v726 = vmul.f32 %v711, %v724
        %v727 = vmul.f32 %v716, %v724
        %v728 = vld [vmem:[%s3] sm:$0x1]
        %v730 = vlaneseq
        %v731 = vshrl.u32 %v730, 7
        %v732 = vsub.s32 0, %v731
        %v733 = vrot.slane %v728, %v732
        %v735 = vadd.f32 %v726, %v733
        %v736 = vadd.f32 %v727, %v733
        %vm737 = vcmp.gt.f32.partialorder %v735, 0.0
        %vm738 = vcmp.gt.f32.partialorder %v736, 0.0
        %v739 = vmul.f32 %v735, 0.01
        %v740 = vmul.f32 %v736, 0.01
        %v741 = vsel %vm737, %v735, %v739
        %v742 = vsel %vm738, %v736, %v740
        %vm743 = vcmask 523264
        %744 = vst.msk [vmem:[#allocation3] sm:$0xff] %vm743, %v741
        %745 = vst.msk [vmem:[#allocation3 + $0x8] sm:$0xff] %vm743, %v742
        %v746 = vld [vmem:[#allocation3] ss:$2 sm:$0xff]
        %s747 = scalar_lea.vmem [#allocation3], 1
        %v748 = vld [vmem:[%s747] ss:$2 sm:$0xff]
        %v749 = vmax.f32 %v746, %v748
        %vm750 = vcmask 516096
        %751 = vst.msk [vmem:[#allocation4] sm:$0x1] %vm750, 0.0
        %752 = vst.msk [vmem:[#allocation4 + $0x9] sm:$0x1] %vm750, 0.0
        %753 = vst.msk [vmem:[#allocation4 + $0x1] sm:$0xff] %vm743, %v749
        %v754 = vld [vmem:[#allocation4] sm:$0xff]
        %v755 = vld [vmem:[#allocation4 + $0x8] sm:$0x3]
        %v758 = vrot.slane %v754, 1
        %v759 = vrot.slane %v755, 1
        %v760 = vsel %vm602, %v758, %v759
        %761 = vrot.lane.b32.xlu0 %v760, 64
        %v762 = vpop.permute.xlu0 %761
        %v764 = vrot.slane %v754, 2
        %v765 = vrot.slane %v755, 2
        %v766 = vsel %vm614, %v764, %v765
        %v767 = vsel %vm743, %v754, %v762
        %v768 = vld [vmem:[%s4] sm:$0xff]
        %v769 = vld [vmem:[%s4 + $0x8] sm:$0xff]
        %v770 = vld [vmem:[%s4 + $0x10] sm:$0xff]
        %v771 = vld [vmem:[%s4 + $0x18] sm:$0xff]
        %v772 = vld [vmem:[%s4 + $0x20] sm:$0xff]
        %v773 = vld [vmem:[%s4 + $0x28] sm:$0xff]
        %v774 = vld [vmem:[%s4 + $0x30] sm:$0xff]
        %v775 = vld [vmem:[%s4 + $0x38] sm:$0xff]
        %v776 = vld [vmem:[%s4 + $0x40] sm:$0xff]
        %v777 = vld [vmem:[%s4 + $0x48] sm:$0xff]
        %v778 = vld [vmem:[%s4 + $0x50] sm:$0xff]
        %v779 = vld [vmem:[%s4 + $0x58] sm:$0xff]
        %v780 = vld [vmem:[%s4 + $0x60] sm:$0xff]
        %v781 = vld [vmem:[%s4 + $0x68] sm:$0xff]
        %v782 = vld [vmem:[%s4 + $0x70] sm:$0xff]
        %v783 = vld [vmem:[%s4 + $0x78] sm:$0xff]
        %v784 = vld [vmem:[%s4 + $0x80] sm:$0xff]
        %v785 = vld [vmem:[%s4 + $0x88] sm:$0xff]
        %v786 = vld [vmem:[%s4 + $0x90] sm:$0xff]
        %v787 = vld [vmem:[%s4 + $0x98] sm:$0xff]
        %v788 = vld [vmem:[%s4 + $0xa0] sm:$0xff]
        %v789 = vld [vmem:[%s4 + $0xa8] sm:$0xff]
        %v790 = vld [vmem:[%s4 + $0xb0] sm:$0xff]
        %v791 = vld [vmem:[%s4 + $0xb8] sm:$0xff]
        %v792 = vsel %vm743, %v766, 0
        %794 = vmatprep.subr.mxu0 0.0
        %795 = vmatpush1.msra.mxu0 %v783
        %796 = vmatprep.subr.mxu0 0.0
        %797 = vmatpush1.msra.mxu0 %v782
        %798 = vmatprep.subr.mxu0 0.0
        %799 = vmatpush1.msra.mxu0 %v781
        %800 = vmatprep.subr.mxu0 0.0
        %801 = vmatpush1.msra.mxu0 %v780
        %802 = vmatprep.subr.mxu0 0.0
        %803 = vmatpush1.msra.mxu0 %v779
        %804 = vmatprep.subr.mxu0 0.0
        %805 = vmatpush1.msra.mxu0 %v778
        %806 = vmatprep.subr.mxu0 0.0
        %807 = vmatpush1.msra.mxu0 %v777
        %808 = vmatprep.subr.mxu0 0.0
        %809 = vmatpush1.msra.mxu0 %v776
        %810 = vmatprep.subr.mxu0 0.0
        %811 = vmatpush1.msra.mxu0 %v775
        %812 = vmatprep.subr.mxu0 0.0
        %813 = vmatpush1.msra.mxu0 %v774
        %814 = vmatprep.subr.mxu0 0.0
        %815 = vmatpush1.msra.mxu0 %v773
        %816 = vmatprep.subr.mxu0 0.0
        %817 = vmatpush1.msra.mxu0 %v772
        %818 = vmatprep.subr.mxu0 0.0
        %819 = vmatpush1.msra.mxu0 %v771
        %820 = vmatprep.subr.mxu0 0.0
        %821 = vmatpush1.msra.mxu0 %v770
        %822 = vmatprep.subr.mxu0 0.0
        %823 = vmatpush1.msra.mxu0 %v769
        %824 = vmatprep.subr.mxu0 0.0
        %825 = vmatpush1.msra.mxu0 %v768
        %826 = vmatprep.subr.mxu0 0.0
        %827 = vmatpush2.msra.mxu0 0.0
        %828 = vmatprep.subr.mxu0 0.0
        %829 = vmatpush2.msra.mxu0 0.0
        %830 = vmatprep.subr.mxu0 0.0
        %831 = vmatpush2.msra.mxu0 0.0
        %832 = vmatprep.subr.mxu0 0.0
        %833 = vmatpush2.msra.mxu0 0.0
        %834 = vmatprep.subr.mxu0 0.0
        %835 = vmatpush2.msra.mxu0 0.0
        %836 = vmatprep.subr.mxu0 0.0
        %837 = vmatpush2.msra.mxu0 0.0
        %838 = vmatprep.subr.mxu0 0.0
        %839 = vmatpush2.msra.mxu0 0.0
        %840 = vmatprep.subr.mxu0 0.0
        %841 = vmatpush2.msra.mxu0 0.0
        %842 = vmatprep.subr.mxu0 0.0
        %843 = vmatpush2.msra.mxu0 %v791
        %844 = vmatprep.subr.mxu0 0.0
        %845 = vmatpush2.msra.mxu0 %v790
        %846 = vmatprep.subr.mxu0 0.0
        %847 = vmatpush2.msra.mxu0 %v789
        %848 = vmatprep.subr.mxu0 0.0
        %849 = vmatpush2.msra.mxu0 %v788
        %850 = vmatprep.subr.mxu0 0.0
        %851 = vmatpush2.msra.mxu0 %v787
        %852 = vmatprep.subr.mxu0 0.0
        %853 = vmatpush2.msra.mxu0 %v786
        %854 = vmatprep.subr.mxu0 0.0
        %855 = vmatpush2.msra.mxu0 %v785
        %856 = vmatprep.subr.mxu0 0.0
        %857 = vmatpush2.msra.mxu0 %v784
        %858 = vmatprep.mubr.f32.mxu0 %v792
        %859 = vmatmul.mubr.f32.gmra.mxu0 %v767
        %v860 = vpop.f32.mrf.mxu0
        %v861 = vadd.f32 0.0, %v860
        %v862 = vpop.f32.mrf.mxu0
        %863 = vdwg.mxu0
        %v864 = vld [vmem:[%s5] sm:$0x1]
        %v866 = vlaneseq
        %v867 = vshrl.u32 %v866, 7
        %v868 = vsub.s32 0, %v867
        %v869 = vrot.slane %v864, %v868
        %v871 = vmul.f32 %v861, %v869
        %v872 = vld [vmem:[%s6] sm:$0x1]
        %v874 = vlaneseq
        %v875 = vshrl.u32 %v874, 7
        %v876 = vsub.s32 0, %v875
        %v877 = vrot.slane %v872, %v876
        %v879 = vadd.f32 %v871, %v877
        %vm880 = vcmp.gt.f32.partialorder %v879, 0.0
        %v881 = vmul.f32 %v879, 0.01
        %v882 = vsel %vm880, %v879, %v881
        %883 = vst [vmem:[#allocation5] sm:$0x1] 0.0
        %884 = vst [vmem:[#allocation5 + $0x9] sm:$0x1] 0.0
        %885 = vst [vmem:[#allocation5 + $0x1] sm:$0xff] %v882
        %v886 = vld [vmem:[#allocation5] sm:$0xff]
        %v887 = vld [vmem:[#allocation5 + $0x8] sm:$0x3]
        %v890 = vrot.slane %v886, 1
        %v891 = vrot.slane %v887, 1
        %v892 = vsel %vm602, %v890, %v891
        %v894 = vrot.slane %v886, 2
        %v895 = vrot.slane %v887, 2
        %v896 = vsel %vm614, %v894, %v895
        %v898 = vld [vmem:[%s7] sm:$0xff]
        %v899 = vld [vmem:[%s7 + $0x8] sm:$0xff]
        %v900 = vld [vmem:[%s7 + $0x10] sm:$0xff]
        %v901 = vld [vmem:[%s7 + $0x18] sm:$0xff]
        %v902 = vld [vmem:[%s7 + $0x20] sm:$0xff]
        %v903 = vld [vmem:[%s7 + $0x28] sm:$0xff]
        %v904 = vld [vmem:[%s7 + $0x30] sm:$0xff]
        %v905 = vld [vmem:[%s7 + $0x38] sm:$0xff]
        %v906 = vld [vmem:[%s7 + $0x40] sm:$0xff]
        %v907 = vld [vmem:[%s7 + $0x48] sm:$0xff]
        %v908 = vld [vmem:[%s7 + $0x50] sm:$0xff]
        %v909 = vld [vmem:[%s7 + $0x58] sm:$0xff]
        %v910 = vld [vmem:[%s7 + $0x60] sm:$0xff]
        %v911 = vld [vmem:[%s7 + $0x68] sm:$0xff]
        %v912 = vld [vmem:[%s7 + $0x70] sm:$0xff]
        %v913 = vld [vmem:[%s7 + $0x78] sm:$0xff]
        %v914 = vld [vmem:[%s7 + $0x80] sm:$0xff]
        %v915 = vld [vmem:[%s7 + $0x88] sm:$0xff]
        %v916 = vld [vmem:[%s7 + $0x90] sm:$0xff]
        %v917 = vld [vmem:[%s7 + $0x98] sm:$0xff]
        %v918 = vld [vmem:[%s7 + $0xa0] sm:$0xff]
        %v919 = vld [vmem:[%s7 + $0xa8] sm:$0xff]
        %v920 = vld [vmem:[%s7 + $0xb0] sm:$0xff]
        %v921 = vld [vmem:[%s7 + $0xb8] sm:$0xff]
        %v922 = vld [vmem:[%s7 + $0xc0] sm:$0xff]
        %v923 = vld [vmem:[%s7 + $0xc8] sm:$0xff]
        %v924 = vld [vmem:[%s7 + $0xd0] sm:$0xff]
        %v925 = vld [vmem:[%s7 + $0xd8] sm:$0xff]
        %v926 = vld [vmem:[%s7 + $0xe0] sm:$0xff]
        %v927 = vld [vmem:[%s7 + $0xe8] sm:$0xff]
        %v928 = vld [vmem:[%s7 + $0xf0] sm:$0xff]
        %v929 = vld [vmem:[%s7 + $0xf8] sm:$0xff]
        %v930 = vld [vmem:[%s7 + $0x100] sm:$0xff]
        %v931 = vld [vmem:[%s7 + $0x108] sm:$0xff]
        %v932 = vld [vmem:[%s7 + $0x110] sm:$0xff]
        %v933 = vld [vmem:[%s7 + $0x118] sm:$0xff]
        %v934 = vld [vmem:[%s7 + $0x120] sm:$0xff]
        %v935 = vld [vmem:[%s7 + $0x128] sm:$0xff]
        %v936 = vld [vmem:[%s7 + $0x130] sm:$0xff]
        %v937 = vld [vmem:[%s7 + $0x138] sm:$0xff]
        %v938 = vld [vmem:[%s7 + $0x140] sm:$0xff]
        %v939 = vld [vmem:[%s7 + $0x148] sm:$0xff]
        %v940 = vld [vmem:[%s7 + $0x150] sm:$0xff]
        %v941 = vld [vmem:[%s7 + $0x158] sm:$0xff]
        %v942 = vld [vmem:[%s7 + $0x160] sm:$0xff]
        %v943 = vld [vmem:[%s7 + $0x168] sm:$0xff]
        %v944 = vld [vmem:[%s7 + $0x170] sm:$0xff]
        %v945 = vld [vmem:[%s7 + $0x178] sm:$0xff]
        %v946 = vld [vmem:[%s7 + $0x180] sm:$0xff]
        %v947 = vld [vmem:[%s7 + $0x188] sm:$0xff]
        %v948 = vld [vmem:[%s7 + $0x190] sm:$0xff]
        %v949 = vld [vmem:[%s7 + $0x198] sm:$0xff]
        %v950 = vld [vmem:[%s7 + $0x1a0] sm:$0xff]
        %v951 = vld [vmem:[%s7 + $0x1a8] sm:$0xff]
        %v952 = vld [vmem:[%s7 + $0x1b0] sm:$0xff]
        %v953 = vld [vmem:[%s7 + $0x1b8] sm:$0xff]
        %v954 = vld [vmem:[%s7 + $0x1c0] sm:$0xff]
        %v955 = vld [vmem:[%s7 + $0x1c8] sm:$0xff]
        %v956 = vld [vmem:[%s7 + $0x1d0] sm:$0xff]
        %v957 = vld [vmem:[%s7 + $0x1d8] sm:$0xff]
        %v958 = vld [vmem:[%s7 + $0x1e0] sm:$0xff]
        %v959 = vld [vmem:[%s7 + $0x1e8] sm:$0xff]
        %v960 = vld [vmem:[%s7 + $0x1f0] sm:$0xff]
        %v961 = vld [vmem:[%s7 + $0x1f8] sm:$0xff]
        %v962 = vld [vmem:[%s7 + $0x200] sm:$0xff]
        %v963 = vld [vmem:[%s7 + $0x208] sm:$0xff]
        %v964 = vld [vmem:[%s7 + $0x210] sm:$0xff]
        %v965 = vld [vmem:[%s7 + $0x218] sm:$0xff]
        %v966 = vld [vmem:[%s7 + $0x220] sm:$0xff]
        %v967 = vld [vmem:[%s7 + $0x228] sm:$0xff]
        %v968 = vld [vmem:[%s7 + $0x230] sm:$0xff]
        %v969 = vld [vmem:[%s7 + $0x238] sm:$0xff]
        %v970 = vld [vmem:[%s7 + $0x240] sm:$0xff]
        %v971 = vld [vmem:[%s7 + $0x248] sm:$0xff]
        %v972 = vld [vmem:[%s7 + $0x250] sm:$0xff]
        %v973 = vld [vmem:[%s7 + $0x258] sm:$0xff]
        %v974 = vld [vmem:[%s7 + $0x260] sm:$0xff]
        %v975 = vld [vmem:[%s7 + $0x268] sm:$0xff]
        %v976 = vld [vmem:[%s7 + $0x270] sm:$0xff]
        %v977 = vld [vmem:[%s7 + $0x278] sm:$0xff]
        %v978 = vld [vmem:[%s7 + $0x280] sm:$0xff]
        %v979 = vld [vmem:[%s7 + $0x288] sm:$0xff]
        %v980 = vld [vmem:[%s7 + $0x290] sm:$0xff]
        %v981 = vld [vmem:[%s7 + $0x298] sm:$0xff]
        %v982 = vld [vmem:[%s7 + $0x2a0] sm:$0xff]
        %v983 = vld [vmem:[%s7 + $0x2a8] sm:$0xff]
        %v984 = vld [vmem:[%s7 + $0x2b0] sm:$0xff]
        %v985 = vld [vmem:[%s7 + $0x2b8] sm:$0xff]
        %v986 = vld [vmem:[%s7 + $0x2c0] sm:$0xff]
        %v987 = vld [vmem:[%s7 + $0x2c8] sm:$0xff]
        %v988 = vld [vmem:[%s7 + $0x2d0] sm:$0xff]
        %v989 = vld [vmem:[%s7 + $0x2d8] sm:$0xff]
        %v990 = vld [vmem:[%s7 + $0x2e0] sm:$0xff]
        %v991 = vld [vmem:[%s7 + $0x2e8] sm:$0xff]
        %v992 = vld [vmem:[%s7 + $0x2f0] sm:$0xff]
        %v993 = vld [vmem:[%s7 + $0x2f8] sm:$0xff]
        %994 = vmatprep.subr.mxu0 %v929
        %995 = vmatpush1.msra.mxu0 %v928
        %996 = vmatprep.subr.mxu0 %v927
        %997 = vmatpush1.msra.mxu0 %v926
        %998 = vmatprep.subr.mxu0 %v925
        %999 = vmatpush1.msra.mxu0 %v924
        %1000 = vmatprep.subr.mxu0 %v923
        %1001 = vmatpush1.msra.mxu0 %v922
        %1002 = vmatprep.subr.mxu0 %v921
        %1003 = vmatpush1.msra.mxu0 %v920
        %1004 = vmatprep.subr.mxu0 %v919
        %1005 = vmatpush1.msra.mxu0 %v918
        %1006 = vmatprep.subr.mxu0 %v917
        %1007 = vmatpush1.msra.mxu0 %v916
        %1008 = vmatprep.subr.mxu0 %v915
        %1009 = vmatpush1.msra.mxu0 %v914
        %1010 = vmatprep.subr.mxu0 %v913
        %1011 = vmatpush1.msra.mxu0 %v912
        %1012 = vmatprep.subr.mxu0 %v911
        %1013 = vmatpush1.msra.mxu0 %v910
        %1014 = vmatprep.subr.mxu0 %v909
        %1015 = vmatpush1.msra.mxu0 %v908
        %1016 = vmatprep.subr.mxu0 %v907
        %1017 = vmatpush1.msra.mxu0 %v906
        %1018 = vmatprep.subr.mxu0 %v905
        %1019 = vmatpush1.msra.mxu0 %v904
        %1020 = vmatprep.subr.mxu0 %v903
        %1021 = vmatpush1.msra.mxu0 %v902
        %1022 = vmatprep.subr.mxu0 %v901
        %1023 = vmatpush1.msra.mxu0 %v900
        %1024 = vmatprep.subr.mxu0 %v899
        %1025 = vmatpush1.msra.mxu0 %v898
        %1026 = vmatprep.subr.mxu0 %v961
        %1027 = vmatpush2.msra.mxu0 %v960
        %1028 = vmatprep.subr.mxu0 %v959
        %1029 = vmatpush2.msra.mxu0 %v958
        %1030 = vmatprep.subr.mxu0 %v957
        %1031 = vmatpush2.msra.mxu0 %v956
        %1032 = vmatprep.subr.mxu0 %v955
        %1033 = vmatpush2.msra.mxu0 %v954
        %1034 = vmatprep.subr.mxu0 %v953
        %1035 = vmatpush2.msra.mxu0 %v952
        %1036 = vmatprep.subr.mxu0 %v951
        %1037 = vmatpush2.msra.mxu0 %v950
        %1038 = vmatprep.subr.mxu0 %v949
        %1039 = vmatpush2.msra.mxu0 %v948
        %1040 = vmatprep.subr.mxu0 %v947
        %1041 = vmatpush2.msra.mxu0 %v946
        %1042 = vmatprep.subr.mxu0 %v945
        %1043 = vmatpush2.msra.mxu0 %v944
        %1044 = vmatprep.subr.mxu0 %v943
        %1045 = vmatpush2.msra.mxu0 %v942
        %1046 = vmatprep.subr.mxu0 %v941
        %1047 = vmatpush2.msra.mxu0 %v940
        %1048 = vmatprep.subr.mxu0 %v939
        %1049 = vmatpush2.msra.mxu0 %v938
        %1050 = vmatprep.subr.mxu0 %v937
        %1051 = vmatpush2.msra.mxu0 %v936
        %1052 = vmatprep.subr.mxu0 %v935
        %1053 = vmatpush2.msra.mxu0 %v934
        %1054 = vmatprep.subr.mxu0 %v933
        %1055 = vmatpush2.msra.mxu0 %v932
        %1056 = vmatprep.subr.mxu0 %v931
        %1057 = vmatpush2.msra.mxu0 %v930
        %1058 = vmatprep.mubr.f32.mxu0 %v892
        %1059 = vmatmul.mubr.f32.gmra.mxu0 %v886
        %v1060 = vpop.f32.mrf.mxu0
        %v1061 = vadd.f32 0.0, %v1060
        %v1062 = vpop.f32.mrf.mxu0
        %v1063 = vadd.f32 0.0, %v1062
        %1064 = vdwg.mxu0
        %1065 = vmatprep.subr.mxu0 %v993
        %1066 = vmatpush1.msra.mxu0 %v992
        %1067 = vmatprep.subr.mxu0 %v991
        %1068 = vmatpush1.msra.mxu0 %v990
        %1069 = vmatprep.subr.mxu0 %v989
        %1070 = vmatpush1.msra.mxu0 %v988
        %1071 = vmatprep.subr.mxu0 %v987
        %1072 = vmatpush1.msra.mxu0 %v986
        %1073 = vmatprep.subr.mxu0 %v985
        %1074 = vmatpush1.msra.mxu0 %v984
        %1075 = vmatprep.subr.mxu0 %v983
        %1076 = vmatpush1.msra.mxu0 %v982
        %1077 = vmatprep.subr.mxu0 %v981
        %1078 = vmatpush1.msra.mxu0 %v980
        %1079 = vmatprep.subr.mxu0 %v979
        %1080 = vmatpush1.msra.mxu0 %v978
        %1081 = vmatprep.subr.mxu0 %v977
        %1082 = vmatpush1.msra.mxu0 %v976
        %1083 = vmatprep.subr.mxu0 %v975
        %1084 = vmatpush1.msra.mxu0 %v974
        %1085 = vmatprep.subr.mxu0 %v973
        %1086 = vmatpush1.msra.mxu0 %v972
        %1087 = vmatprep.subr.mxu0 %v971
        %1088 = vmatpush1.msra.mxu0 %v970
        %1089 = vmatprep.subr.mxu0 %v969
        %1090 = vmatpush1.msra.mxu0 %v968
        %1091 = vmatprep.subr.mxu0 %v967
        %1092 = vmatpush1.msra.mxu0 %v966
        %1093 = vmatprep.subr.mxu0 %v965
        %1094 = vmatpush1.msra.mxu0 %v964
        %1095 = vmatprep.subr.mxu0 %v963
        %1096 = vmatpush1.msra.mxu0 %v962
        %1097 = vmatprep.subr.mxu0 0.0
        %1098 = vmatpush2.msra.mxu0 0.0
        %1099 = vmatprep.subr.mxu0 0.0
        %1100 = vmatpush2.msra.mxu0 0.0
        %1101 = vmatprep.subr.mxu0 0.0
        %1102 = vmatpush2.msra.mxu0 0.0
        %1103 = vmatprep.subr.mxu0 0.0
        %1104 = vmatpush2.msra.mxu0 0.0
        %1105 = vmatprep.subr.mxu0 0.0
        %1106 = vmatpush2.msra.mxu0 0.0
        %1107 = vmatprep.subr.mxu0 0.0
        %1108 = vmatpush2.msra.mxu0 0.0
        %1109 = vmatprep.subr.mxu0 0.0
        %1110 = vmatpush2.msra.mxu0 0.0
        %1111 = vmatprep.subr.mxu0 0.0
        %1112 = vmatpush2.msra.mxu0 0.0
        %1113 = vmatprep.subr.mxu0 0.0
        %1114 = vmatpush2.msra.mxu0 0.0
        %1115 = vmatprep.subr.mxu0 0.0
        %1116 = vmatpush2.msra.mxu0 0.0
        %1117 = vmatprep.subr.mxu0 0.0
        %1118 = vmatpush2.msra.mxu0 0.0
        %1119 = vmatprep.subr.mxu0 0.0
        %1120 = vmatpush2.msra.mxu0 0.0
        %1121 = vmatprep.subr.mxu0 0.0
        %1122 = vmatpush2.msra.mxu0 0.0
        %1123 = vmatprep.subr.mxu0 0.0
        %1124 = vmatpush2.msra.mxu0 0.0
        %1125 = vmatprep.subr.mxu0 0.0
        %1126 = vmatpush2.msra.mxu0 0.0
        %1127 = vmatprep.subr.mxu0 0.0
        %1128 = vmatpush2.msra.mxu0 0.0
        %1129 = vmatprep.mubr.f32.mxu0 0.0
        %1130 = vmatmul.mubr.f32.gmra.mxu0 %v896
        %v1131 = vpop.f32.mrf.mxu0
        %v1132 = vadd.f32 %v1061, %v1131
        %v1133 = vpop.f32.mrf.mxu0
        %v1134 = vadd.f32 %v1063, %v1133
        %1135 = vdwg.mxu0
        %v1136 = vld [vmem:[%s8] sm:$0x3]
        %v1138 = vlaneseq
        %v1139 = vshrl.u32 %v1138, 7
        %v1140 = vsub.s32 0, %v1139
        %v1141 = vrot.slane %v1136, %v1140
        %v1142 = vlaneseq
        %v1143 = vshrl.u32 %v1142, 7
        %v1144 = vsub.s32 1, %v1143
        %v1145 = vrot.slane %v1136, %v1144
        %v1148 = vmul.f32 %v1132, %v1141
        %v1149 = vmul.f32 %v1134, %v1145
        %v1150 = vld [vmem:[%s9] sm:$0x3]
        %v1152 = vlaneseq
        %v1153 = vshrl.u32 %v1152, 7
        %v1154 = vsub.s32 0, %v1153
        %v1155 = vrot.slane %v1150, %v1154
        %v1156 = vlaneseq
        %v1157 = vshrl.u32 %v1156, 7
        %v1158 = vsub.s32 1, %v1157
        %v1159 = vrot.slane %v1150, %v1158
        %v1162 = vadd.f32 %v1148, %v1155
        %v1163 = vadd.f32 %v1149, %v1159
        %vm1164 = vcmp.gt.f32.partialorder %v1162, 0.0
        %vm1165 = vcmp.gt.f32.partialorder %v1163, 0.0
        %v1166 = vmul.f32 %v1162, 0.01
        %v1167 = vmul.f32 %v1163, 0.01
        %v1168 = vsel %vm1164, %v1162, %v1166
        %v1169 = vsel %vm1165, %v1163, %v1167
        %v1170 = vlaneseq
        %vm1171 = vcmp.ge.s32.totalorder %v1170, 0
        %vm1172 = vcmp.lt.s32.totalorder %v1170, 256
        %vm1173 = vmand %vm1171, %vm1172
        %1174 = vst.msk [vmem:[#allocation6] ss:$8 sm:$0x3] %vm1173, 0.0
        %1175 = vst.msk [vmem:[#allocation6] ss:$8 sm:$0x0] %vm1173, 0.0
        %s1176 = scalar_lea.vmem [#allocation6], 17
        %1177 = vst.msk [vmem:[%s1176] ss:$8 sm:$0x3] %vm1173, 0.0
        %1178 = vst.msk [vmem:[%s1176] ss:$8 sm:$0x0] %vm1173, 0.0
        %v1181 = vrot.slane %v1168, 7
        %v1182 = vrot.slane %v1169, 7
        %1185 = vst [vmem:[#allocation6] sm:$0xfe] %v1181
        %1186 = vst [vmem:[#allocation6 + $0x8] sm:$0xfe] %v1182
        %1187 = vst [vmem:[#allocation6 + $0x10] sm:$0x1] %v1181
        %1188 = vst [vmem:[#allocation6 + $0x18] sm:$0x1] %v1182
        %v1189 = vld [vmem:[#allocation6] sm:$0xff]
        %v1190 = vld [vmem:[#allocation6 + $0x8] sm:$0xff]
        %v1191 = vld [vmem:[#allocation6 + $0x10] sm:$0x3]
        %v1192 = vld [vmem:[#allocation6 + $0x18] sm:$0x3]
        %v1197 = vrot.slane %v1189, 1
        %v1198 = vrot.slane %v1191, 1
        %v1199 = vsel %vm602, %v1197, %v1198
        %v1200 = vrot.slane %v1190, 1
        %v1201 = vrot.slane %v1192, 1
        %v1202 = vsel %vm602, %v1200, %v1201
        %v1205 = vrot.slane %v1189, 2
        %v1206 = vrot.slane %v1191, 2
        %v1207 = vsel %vm614, %v1205, %v1206
        %v1208 = vrot.slane %v1190, 2
        %v1209 = vrot.slane %v1192, 2
        %v1210 = vsel %vm614, %v1208, %v1209
        %v1213 = vld [vmem:[#allocation7] sm:$0xff]
        %v1214 = vld [vmem:[#allocation7 + $0x8] sm:$0xff]
        %v1215 = vld [vmem:[#allocation7 + $0x10] sm:$0xff]
        %v1216 = vld [vmem:[#allocation7 + $0x18] sm:$0xff]
        %v1217 = vld [vmem:[#allocation7 + $0x20] sm:$0xff]
        %v1218 = vld [vmem:[#allocation7 + $0x28] sm:$0xff]
        %v1219 = vld [vmem:[#allocation7 + $0x30] sm:$0xff]
        %v1220 = vld [vmem:[#allocation7 + $0x38] sm:$0xff]
        %v1221 = vld [vmem:[#allocation7 + $0x40] sm:$0xff]
        %v1222 = vld [vmem:[#allocation7 + $0x48] sm:$0xff]
        %v1223 = vld [vmem:[#allocation7 + $0x50] sm:$0xff]
        %v1224 = vld [vmem:[#allocation7 + $0x58] sm:$0xff]
        %v1225 = vld [vmem:[#allocation7 + $0x60] sm:$0xff]
        %v1226 = vld [vmem:[#allocation7 + $0x68] sm:$0xff]
        %v1227 = vld [vmem:[#allocation7 + $0x70] sm:$0xff]
        %v1228 = vld [vmem:[#allocation7 + $0x78] sm:$0xff]
        %v1229 = vld [vmem:[#allocation7 + $0x80] sm:$0xff]
        %v1230 = vld [vmem:[#allocation7 + $0x88] sm:$0xff]
        %v1231 = vld [vmem:[#allocation7 + $0x90] sm:$0xff]
        %v1232 = vld [vmem:[#allocation7 + $0x98] sm:$0xff]
        %v1233 = vld [vmem:[#allocation7 + $0xa0] sm:$0xff]
        %v1234 = vld [vmem:[#allocation7 + $0xa8] sm:$0xff]
        %v1235 = vld [vmem:[#allocation7 + $0xb0] sm:$0xff]
        %v1236 = vld [vmem:[#allocation7 + $0xb8] sm:$0xff]
        %v1237 = vld [vmem:[#allocation7 + $0xc0] sm:$0xff]
        %v1238 = vld [vmem:[#allocation7 + $0xc8] sm:$0xff]
        %v1239 = vld [vmem:[#allocation7 + $0xd0] sm:$0xff]
        %v1240 = vld [vmem:[#allocation7 + $0xd8] sm:$0xff]
        %v1241 = vld [vmem:[#allocation7 + $0xe0] sm:$0xff]
        %v1242 = vld [vmem:[#allocation7 + $0xe8] sm:$0xff]
        %v1243 = vld [vmem:[#allocation7 + $0xf0] sm:$0xff]
        %v1244 = vld [vmem:[#allocation7 + $0xf8] sm:$0xff]
        %v1245 = vld [vmem:[#allocation7 + $0x100] sm:$0xff]
        %v1246 = vld [vmem:[#allocation7 + $0x108] sm:$0xff]
        %v1247 = vld [vmem:[#allocation7 + $0x110] sm:$0xff]
        %v1248 = vld [vmem:[#allocation7 + $0x118] sm:$0xff]
        %v1249 = vld [vmem:[#allocation7 + $0x120] sm:$0xff]
        %v1250 = vld [vmem:[#allocation7 + $0x128] sm:$0xff]
        %v1251 = vld [vmem:[#allocation7 + $0x130] sm:$0xff]
        %v1252 = vld [vmem:[#allocation7 + $0x138] sm:$0xff]
        %v1253 = vld [vmem:[#allocation7 + $0x140] sm:$0xff]
        %v1254 = vld [vmem:[#allocation7 + $0x148] sm:$0xff]
        %v1255 = vld [vmem:[#allocation7 + $0x150] sm:$0xff]
        %v1256 = vld [vmem:[#allocation7 + $0x158] sm:$0xff]
        %v1257 = vld [vmem:[#allocation7 + $0x160] sm:$0xff]
        %v1258 = vld [vmem:[#allocation7 + $0x168] sm:$0xff]
        %v1259 = vld [vmem:[#allocation7 + $0x170] sm:$0xff]
        %v1260 = vld [vmem:[#allocation7 + $0x178] sm:$0xff]
        %v1261 = vld [vmem:[#allocation7 + $0x180] sm:$0xff]
        %v1262 = vld [vmem:[#allocation7 + $0x188] sm:$0xff]
        %v1263 = vld [vmem:[#allocation7 + $0x190] sm:$0xff]
        %v1264 = vld [vmem:[#allocation7 + $0x198] sm:$0xff]
        %v1265 = vld [vmem:[#allocation7 + $0x1a0] sm:$0xff]
        %v1266 = vld [vmem:[#allocation7 + $0x1a8] sm:$0xff]
        %v1267 = vld [vmem:[#allocation7 + $0x1b0] sm:$0xff]
        %v1268 = vld [vmem:[#allocation7 + $0x1b8] sm:$0xff]
        %v1269 = vld [vmem:[#allocation7 + $0x1c0] sm:$0xff]
        %v1270 = vld [vmem:[#allocation7 + $0x1c8] sm:$0xff]
        %v1271 = vld [vmem:[#allocation7 + $0x1d0] sm:$0xff]
        %v1272 = vld [vmem:[#allocation7 + $0x1d8] sm:$0xff]
        %v1273 = vld [vmem:[#allocation7 + $0x1e0] sm:$0xff]
        %v1274 = vld [vmem:[#allocation7 + $0x1e8] sm:$0xff]
        %v1275 = vld [vmem:[#allocation7 + $0x1f0] sm:$0xff]
        %v1276 = vld [vmem:[#allocation7 + $0x1f8] sm:$0xff]
        %v1277 = vld [vmem:[#allocation7 + $0x200] sm:$0xff]
        %v1278 = vld [vmem:[#allocation7 + $0x208] sm:$0xff]
        %v1279 = vld [vmem:[#allocation7 + $0x210] sm:$0xff]
        %v1280 = vld [vmem:[#allocation7 + $0x218] sm:$0xff]
        %v1281 = vld [vmem:[#allocation7 + $0x220] sm:$0xff]
        %v1282 = vld [vmem:[#allocation7 + $0x228] sm:$0xff]
        %v1283 = vld [vmem:[#allocation7 + $0x230] sm:$0xff]
        %v1284 = vld [vmem:[#allocation7 + $0x238] sm:$0xff]
        %v1285 = vld [vmem:[#allocation7 + $0x240] sm:$0xff]
        %v1286 = vld [vmem:[#allocation7 + $0x248] sm:$0xff]
        %v1287 = vld [vmem:[#allocation7 + $0x250] sm:$0xff]
        %v1288 = vld [vmem:[#allocation7 + $0x258] sm:$0xff]
        %v1289 = vld [vmem:[#allocation7 + $0x260] sm:$0xff]
        %v1290 = vld [vmem:[#allocation7 + $0x268] sm:$0xff]
        %v1291 = vld [vmem:[#allocation7 + $0x270] sm:$0xff]
        %v1292 = vld [vmem:[#allocation7 + $0x278] sm:$0xff]
        %v1293 = vld [vmem:[#allocation7 + $0x280] sm:$0xff]
        %v1294 = vld [vmem:[#allocation7 + $0x288] sm:$0xff]
        %v1295 = vld [vmem:[#allocation7 + $0x290] sm:$0xff]
        %v1296 = vld [vmem:[#allocation7 + $0x298] sm:$0xff]
        %v1297 = vld [vmem:[#allocation7 + $0x2a0] sm:$0xff]
        %v1298 = vld [vmem:[#allocation7 + $0x2a8] sm:$0xff]
        %v1299 = vld [vmem:[#allocation7 + $0x2b0] sm:$0xff]
        %v1300 = vld [vmem:[#allocation7 + $0x2b8] sm:$0xff]
        %v1301 = vld [vmem:[#allocation7 + $0x2c0] sm:$0xff]
        %v1302 = vld [vmem:[#allocation7 + $0x2c8] sm:$0xff]
        %v1303 = vld [vmem:[#allocation7 + $0x2d0] sm:$0xff]
        %v1304 = vld [vmem:[#allocation7 + $0x2d8] sm:$0xff]
        %v1305 = vld [vmem:[#allocation7 + $0x2e0] sm:$0xff]
        %v1306 = vld [vmem:[#allocation7 + $0x2e8] sm:$0xff]
        %v1307 = vld [vmem:[#allocation7 + $0x2f0] sm:$0xff]
        %v1308 = vld [vmem:[#allocation7 + $0x2f8] sm:$0xff]
        %v1309 = vld [vmem:[#allocation7 + $0x300] sm:$0xff]
        %v1310 = vld [vmem:[#allocation7 + $0x308] sm:$0xff]
        %v1311 = vld [vmem:[#allocation7 + $0x310] sm:$0xff]
        %v1312 = vld [vmem:[#allocation7 + $0x318] sm:$0xff]
        %v1313 = vld [vmem:[#allocation7 + $0x320] sm:$0xff]
        %v1314 = vld [vmem:[#allocation7 + $0x328] sm:$0xff]
        %v1315 = vld [vmem:[#allocation7 + $0x330] sm:$0xff]
        %v1316 = vld [vmem:[#allocation7 + $0x338] sm:$0xff]
        %v1317 = vld [vmem:[#allocation7 + $0x340] sm:$0xff]
        %v1318 = vld [vmem:[#allocation7 + $0x348] sm:$0xff]
        %v1319 = vld [vmem:[#allocation7 + $0x350] sm:$0xff]
        %v1320 = vld [vmem:[#allocation7 + $0x358] sm:$0xff]
        %v1321 = vld [vmem:[#allocation7 + $0x360] sm:$0xff]
        %v1322 = vld [vmem:[#allocation7 + $0x368] sm:$0xff]
        %v1323 = vld [vmem:[#allocation7 + $0x370] sm:$0xff]
        %v1324 = vld [vmem:[#allocation7 + $0x378] sm:$0xff]
        %v1325 = vld [vmem:[#allocation7 + $0x380] sm:$0xff]
        %v1326 = vld [vmem:[#allocation7 + $0x388] sm:$0xff]
        %v1327 = vld [vmem:[#allocation7 + $0x390] sm:$0xff]
        %v1328 = vld [vmem:[#allocation7 + $0x398] sm:$0xff]
        %v1329 = vld [vmem:[#allocation7 + $0x3a0] sm:$0xff]
        %v1330 = vld [vmem:[#allocation7 + $0x3a8] sm:$0xff]
        %v1331 = vld [vmem:[#allocation7 + $0x3b0] sm:$0xff]
        %v1332 = vld [vmem:[#allocation7 + $0x3b8] sm:$0xff]
        %v1333 = vld [vmem:[#allocation7 + $0x3c0] sm:$0xff]
        %v1334 = vld [vmem:[#allocation7 + $0x3c8] sm:$0xff]
        %v1335 = vld [vmem:[#allocation7 + $0x3d0] sm:$0xff]
        %v1336 = vld [vmem:[#allocation7 + $0x3d8] sm:$0xff]
        %v1337 = vld [vmem:[#allocation7 + $0x3e0] sm:$0xff]
        %v1338 = vld [vmem:[#allocation7 + $0x3e8] sm:$0xff]
        %v1339 = vld [vmem:[#allocation7 + $0x3f0] sm:$0xff]
        %v1340 = vld [vmem:[#allocation7 + $0x3f8] sm:$0xff]
        %v1341 = vld [vmem:[#allocation7 + $0x400] sm:$0xff]
        %v1342 = vld [vmem:[#allocation7 + $0x408] sm:$0xff]
        %v1343 = vld [vmem:[#allocation7 + $0x410] sm:$0xff]
        %v1344 = vld [vmem:[#allocation7 + $0x418] sm:$0xff]
        %v1345 = vld [vmem:[#allocation7 + $0x420] sm:$0xff]
        %v1346 = vld [vmem:[#allocation7 + $0x428] sm:$0xff]
        %v1347 = vld [vmem:[#allocation7 + $0x430] sm:$0xff]
        %v1348 = vld [vmem:[#allocation7 + $0x438] sm:$0xff]
        %v1349 = vld [vmem:[#allocation7 + $0x440] sm:$0xff]
        %v1350 = vld [vmem:[#allocation7 + $0x448] sm:$0xff]
        %v1351 = vld [vmem:[#allocation7 + $0x450] sm:$0xff]
        %v1352 = vld [vmem:[#allocation7 + $0x458] sm:$0xff]
        %v1353 = vld [vmem:[#allocation7 + $0x460] sm:$0xff]
        %v1354 = vld [vmem:[#allocation7 + $0x468] sm:$0xff]
        %v1355 = vld [vmem:[#allocation7 + $0x470] sm:$0xff]
        %v1356 = vld [vmem:[#allocation7 + $0x478] sm:$0xff]
        %v1357 = vld [vmem:[#allocation7 + $0x480] sm:$0xff]
        %v1358 = vld [vmem:[#allocation7 + $0x488] sm:$0xff]
        %v1359 = vld [vmem:[#allocation7 + $0x490] sm:$0xff]
        %v1360 = vld [vmem:[#allocation7 + $0x498] sm:$0xff]
        %v1361 = vld [vmem:[#allocation7 + $0x4a0] sm:$0xff]
        %v1362 = vld [vmem:[#allocation7 + $0x4a8] sm:$0xff]
        %v1363 = vld [vmem:[#allocation7 + $0x4b0] sm:$0xff]
        %v1364 = vld [vmem:[#allocation7 + $0x4b8] sm:$0xff]
        %v1365 = vld [vmem:[#allocation7 + $0x4c0] sm:$0xff]
        %v1366 = vld [vmem:[#allocation7 + $0x4c8] sm:$0xff]
        %v1367 = vld [vmem:[#allocation7 + $0x4d0] sm:$0xff]
        %v1368 = vld [vmem:[#allocation7 + $0x4d8] sm:$0xff]
        %v1369 = vld [vmem:[#allocation7 + $0x4e0] sm:$0xff]
        %v1370 = vld [vmem:[#allocation7 + $0x4e8] sm:$0xff]
        %v1371 = vld [vmem:[#allocation7 + $0x4f0] sm:$0xff]
        %v1372 = vld [vmem:[#allocation7 + $0x4f8] sm:$0xff]
        %v1373 = vld [vmem:[#allocation7 + $0x500] sm:$0xff]
        %v1374 = vld [vmem:[#allocation7 + $0x508] sm:$0xff]
        %v1375 = vld [vmem:[#allocation7 + $0x510] sm:$0xff]
        %v1376 = vld [vmem:[#allocation7 + $0x518] sm:$0xff]
        %v1377 = vld [vmem:[#allocation7 + $0x520] sm:$0xff]
        %v1378 = vld [vmem:[#allocation7 + $0x528] sm:$0xff]
        %v1379 = vld [vmem:[#allocation7 + $0x530] sm:$0xff]
        %v1380 = vld [vmem:[#allocation7 + $0x538] sm:$0xff]
        %v1381 = vld [vmem:[#allocation7 + $0x540] sm:$0xff]
        %v1382 = vld [vmem:[#allocation7 + $0x548] sm:$0xff]
        %v1383 = vld [vmem:[#allocation7 + $0x550] sm:$0xff]
        %v1384 = vld [vmem:[#allocation7 + $0x558] sm:$0xff]
        %v1385 = vld [vmem:[#allocation7 + $0x560] sm:$0xff]
        %v1386 = vld [vmem:[#allocation7 + $0x568] sm:$0xff]
        %v1387 = vld [vmem:[#allocation7 + $0x570] sm:$0xff]
        %v1388 = vld [vmem:[#allocation7 + $0x578] sm:$0xff]
        %v1389 = vld [vmem:[#allocation7 + $0x580] sm:$0xff]
        %v1390 = vld [vmem:[#allocation7 + $0x588] sm:$0xff]
        %v1391 = vld [vmem:[#allocation7 + $0x590] sm:$0xff]
        %v1392 = vld [vmem:[#allocation7 + $0x598] sm:$0xff]
        %v1393 = vld [vmem:[#allocation7 + $0x5a0] sm:$0xff]
        %v1394 = vld [vmem:[#allocation7 + $0x5a8] sm:$0xff]
        %v1395 = vld [vmem:[#allocation7 + $0x5b0] sm:$0xff]
        %v1396 = vld [vmem:[#allocation7 + $0x5b8] sm:$0xff]
        %v1397 = vld [vmem:[#allocation7 + $0x5c0] sm:$0xff]
        %v1398 = vld [vmem:[#allocation7 + $0x5c8] sm:$0xff]
        %v1399 = vld [vmem:[#allocation7 + $0x5d0] sm:$0xff]
        %v1400 = vld [vmem:[#allocation7 + $0x5d8] sm:$0xff]
        %v1401 = vld [vmem:[#allocation7 + $0x5e0] sm:$0xff]
        %v1402 = vld [vmem:[#allocation7 + $0x5e8] sm:$0xff]
        %v1403 = vld [vmem:[#allocation7 + $0x5f0] sm:$0xff]
        %v1404 = vld [vmem:[#allocation7 + $0x5f8] sm:$0xff]
        %1405 = vmatprep.subr.mxu0 %v1244
        %1406 = vmatpush1.msra.mxu0 %v1243
        %1407 = vmatprep.subr.mxu0 %v1242
        %1408 = vmatpush1.msra.mxu0 %v1241
        %1409 = vmatprep.subr.mxu0 %v1240
        %1410 = vmatpush1.msra.mxu0 %v1239
        %1411 = vmatprep.subr.mxu0 %v1238
        %1412 = vmatpush1.msra.mxu0 %v1237
        %1413 = vmatprep.subr.mxu0 %v1236
        %1414 = vmatpush1.msra.mxu0 %v1235
        %1415 = vmatprep.subr.mxu0 %v1234
        %1416 = vmatpush1.msra.mxu0 %v1233
        %1417 = vmatprep.subr.mxu0 %v1232
        %1418 = vmatpush1.msra.mxu0 %v1231
        %1419 = vmatprep.subr.mxu0 %v1230
        %1420 = vmatpush1.msra.mxu0 %v1229
        %1421 = vmatprep.subr.mxu0 %v1228
        %1422 = vmatpush1.msra.mxu0 %v1227
        %1423 = vmatprep.subr.mxu0 %v1226
        %1424 = vmatpush1.msra.mxu0 %v1225
        %1425 = vmatprep.subr.mxu0 %v1224
        %1426 = vmatpush1.msra.mxu0 %v1223
        %1427 = vmatprep.subr.mxu0 %v1222
        %1428 = vmatpush1.msra.mxu0 %v1221
        %1429 = vmatprep.subr.mxu0 %v1220
        %1430 = vmatpush1.msra.mxu0 %v1219
        %1431 = vmatprep.subr.mxu0 %v1218
        %1432 = vmatpush1.msra.mxu0 %v1217
        %1433 = vmatprep.subr.mxu0 %v1216
        %1434 = vmatpush1.msra.mxu0 %v1215
        %1435 = vmatprep.subr.mxu0 %v1214
        %1436 = vmatpush1.msra.mxu0 %v1213
        %1437 = vmatprep.subr.mxu0 %v1276
        %1438 = vmatpush2.msra.mxu0 %v1275
        %1439 = vmatprep.subr.mxu0 %v1274
        %1440 = vmatpush2.msra.mxu0 %v1273
        %1441 = vmatprep.subr.mxu0 %v1272
        %1442 = vmatpush2.msra.mxu0 %v1271
        %1443 = vmatprep.subr.mxu0 %v1270
        %1444 = vmatpush2.msra.mxu0 %v1269
        %1445 = vmatprep.subr.mxu0 %v1268
        %1446 = vmatpush2.msra.mxu0 %v1267
        %1447 = vmatprep.subr.mxu0 %v1266
        %1448 = vmatpush2.msra.mxu0 %v1265
        %1449 = vmatprep.subr.mxu0 %v1264
        %1450 = vmatpush2.msra.mxu0 %v1263
        %1451 = vmatprep.subr.mxu0 %v1262
        %1452 = vmatpush2.msra.mxu0 %v1261
        %1453 = vmatprep.subr.mxu0 %v1260
        %1454 = vmatpush2.msra.mxu0 %v1259
        %1455 = vmatprep.subr.mxu0 %v1258
        %1456 = vmatpush2.msra.mxu0 %v1257
        %1457 = vmatprep.subr.mxu0 %v1256
        %1458 = vmatpush2.msra.mxu0 %v1255
        %1459 = vmatprep.subr.mxu0 %v1254
        %1460 = vmatpush2.msra.mxu0 %v1253
        %1461 = vmatprep.subr.mxu0 %v1252
        %1462 = vmatpush2.msra.mxu0 %v1251
        %1463 = vmatprep.subr.mxu0 %v1250
        %1464 = vmatpush2.msra.mxu0 %v1249
        %1465 = vmatprep.subr.mxu0 %v1248
        %1466 = vmatpush2.msra.mxu0 %v1247
        %1467 = vmatprep.subr.mxu0 %v1246
        %1468 = vmatpush2.msra.mxu0 %v1245
        %1469 = vmatprep.mubr.f32.mxu0 %v1190
        %1470 = vmatmul.mubr.f32.gmra.mxu0 %v1189
        %v1471 = vpop.f32.mrf.mxu0
        %v1472 = vadd.f32 0.0, %v1471
        %v1473 = vpop.f32.mrf.mxu0
        %v1474 = vadd.f32 0.0, %v1473
        %1475 = vdwg.mxu0
        %1476 = vmatprep.subr.mxu0 %v1308
        %1477 = vmatpush1.msra.mxu0 %v1307
        %1478 = vmatprep.subr.mxu0 %v1306
        %1479 = vmatpush1.msra.mxu0 %v1305
        %1480 = vmatprep.subr.mxu0 %v1304
        %1481 = vmatpush1.msra.mxu0 %v1303
        %1482 = vmatprep.subr.mxu0 %v1302
        %1483 = vmatpush1.msra.mxu0 %v1301
        %1484 = vmatprep.subr.mxu0 %v1300
        %1485 = vmatpush1.msra.mxu0 %v1299
        %1486 = vmatprep.subr.mxu0 %v1298
        %1487 = vmatpush1.msra.mxu0 %v1297
        %1488 = vmatprep.subr.mxu0 %v1296
        %1489 = vmatpush1.msra.mxu0 %v1295
        %1490 = vmatprep.subr.mxu0 %v1294
        %1491 = vmatpush1.msra.mxu0 %v1293
        %1492 = vmatprep.subr.mxu0 %v1292
        %1493 = vmatpush1.msra.mxu0 %v1291
        %1494 = vmatprep.subr.mxu0 %v1290
        %1495 = vmatpush1.msra.mxu0 %v1289
        %1496 = vmatprep.subr.mxu0 %v1288
        %1497 = vmatpush1.msra.mxu0 %v1287
        %1498 = vmatprep.subr.mxu0 %v1286
        %1499 = vmatpush1.msra.mxu0 %v1285
        %1500 = vmatprep.subr.mxu0 %v1284
        %1501 = vmatpush1.msra.mxu0 %v1283
        %1502 = vmatprep.subr.mxu0 %v1282
        %1503 = vmatpush1.msra.mxu0 %v1281
        %1504 = vmatprep.subr.mxu0 %v1280
        %1505 = vmatpush1.msra.mxu0 %v1279
        %1506 = vmatprep.subr.mxu0 %v1278
        %1507 = vmatpush1.msra.mxu0 %v1277
        %1508 = vmatprep.subr.mxu0 %v1340
        %1509 = vmatpush2.msra.mxu0 %v1339
        %1510 = vmatprep.subr.mxu0 %v1338
        %1511 = vmatpush2.msra.mxu0 %v1337
        %1512 = vmatprep.subr.mxu0 %v1336
        %1513 = vmatpush2.msra.mxu0 %v1335
        %1514 = vmatprep.subr.mxu0 %v1334
        %1515 = vmatpush2.msra.mxu0 %v1333
        %1516 = vmatprep.subr.mxu0 %v1332
        %1517 = vmatpush2.msra.mxu0 %v1331
        %1518 = vmatprep.subr.mxu0 %v1330
        %1519 = vmatpush2.msra.mxu0 %v1329
        %1520 = vmatprep.subr.mxu0 %v1328
        %1521 = vmatpush2.msra.mxu0 %v1327
        %1522 = vmatprep.subr.mxu0 %v1326
        %1523 = vmatpush2.msra.mxu0 %v1325
        %1524 = vmatprep.subr.mxu0 %v1324
        %1525 = vmatpush2.msra.mxu0 %v1323
        %1526 = vmatprep.subr.mxu0 %v1322
        %1527 = vmatpush2.msra.mxu0 %v1321
        %1528 = vmatprep.subr.mxu0 %v1320
        %1529 = vmatpush2.msra.mxu0 %v1319
        %1530 = vmatprep.subr.mxu0 %v1318
        %1531 = vmatpush2.msra.mxu0 %v1317
        %1532 = vmatprep.subr.mxu0 %v1316
        %1533 = vmatpush2.msra.mxu0 %v1315
        %1534 = vmatprep.subr.mxu0 %v1314
        %1535 = vmatpush2.msra.mxu0 %v1313
        %1536 = vmatprep.subr.mxu0 %v1312
        %1537 = vmatpush2.msra.mxu0 %v1311
        %1538 = vmatprep.subr.mxu0 %v1310
        %1539 = vmatpush2.msra.mxu0 %v1309
        %1540 = vmatprep.mubr.f32.mxu0 %v1202
        %1541 = vmatmul.mubr.f32.gmra.mxu0 %v1199
        %v1542 = vpop.f32.mrf.mxu0
        %v1543 = vadd.f32 %v1472, %v1542
        %v1544 = vpop.f32.mrf.mxu0
        %v1545 = vadd.f32 %v1474, %v1544
        %1546 = vdwg.mxu0
        %1547 = vmatprep.subr.mxu0 %v1372
        %1548 = vmatpush1.msra.mxu0 %v1371
        %1549 = vmatprep.subr.mxu0 %v1370
        %1550 = vmatpush1.msra.mxu0 %v1369
        %1551 = vmatprep.subr.mxu0 %v1368
        %1552 = vmatpush1.msra.mxu0 %v1367
        %1553 = vmatprep.subr.mxu0 %v1366
        %1554 = vmatpush1.msra.mxu0 %v1365
        %1555 = vmatprep.subr.mxu0 %v1364
        %1556 = vmatpush1.msra.mxu0 %v1363
        %1557 = vmatprep.subr.mxu0 %v1362
        %1558 = vmatpush1.msra.mxu0 %v1361
        %1559 = vmatprep.subr.mxu0 %v1360
        %1560 = vmatpush1.msra.mxu0 %v1359
        %1561 = vmatprep.subr.mxu0 %v1358
        %1562 = vmatpush1.msra.mxu0 %v1357
        %1563 = vmatprep.subr.mxu0 %v1356
        %1564 = vmatpush1.msra.mxu0 %v1355
        %1565 = vmatprep.subr.mxu0 %v1354
        %1566 = vmatpush1.msra.mxu0 %v1353
        %1567 = vmatprep.subr.mxu0 %v1352
        %1568 = vmatpush1.msra.mxu0 %v1351
        %1569 = vmatprep.subr.mxu0 %v1350
        %1570 = vmatpush1.msra.mxu0 %v1349
        %1571 = vmatprep.subr.mxu0 %v1348
        %1572 = vmatpush1.msra.mxu0 %v1347
        %1573 = vmatprep.subr.mxu0 %v1346
        %1574 = vmatpush1.msra.mxu0 %v1345
        %1575 = vmatprep.subr.mxu0 %v1344
        %1576 = vmatpush1.msra.mxu0 %v1343
        %1577 = vmatprep.subr.mxu0 %v1342
        %1578 = vmatpush1.msra.mxu0 %v1341
        %1579 = vmatprep.subr.mxu0 %v1404
        %1580 = vmatpush2.msra.mxu0 %v1403
        %1581 = vmatprep.subr.mxu0 %v1402
        %1582 = vmatpush2.msra.mxu0 %v1401
        %1583 = vmatprep.subr.mxu0 %v1400
        %1584 = vmatpush2.msra.mxu0 %v1399
        %1585 = vmatprep.subr.mxu0 %v1398
        %1586 = vmatpush2.msra.mxu0 %v1397
        %1587 = vmatprep.subr.mxu0 %v1396
        %1588 = vmatpush2.msra.mxu0 %v1395
        %1589 = vmatprep.subr.mxu0 %v1394
        %1590 = vmatpush2.msra.mxu0 %v1393
        %1591 = vmatprep.subr.mxu0 %v1392
        %1592 = vmatpush2.msra.mxu0 %v1391
        %1593 = vmatprep.subr.mxu0 %v1390
        %1594 = vmatpush2.msra.mxu0 %v1389
        %1595 = vmatprep.subr.mxu0 %v1388
        %1596 = vmatpush2.msra.mxu0 %v1387
        %1597 = vmatprep.subr.mxu0 %v1386
        %1598 = vmatpush2.msra.mxu0 %v1385
        %1599 = vmatprep.subr.mxu0 %v1384
        %1600 = vmatpush2.msra.mxu0 %v1383
        %1601 = vmatprep.subr.mxu0 %v1382
        %1602 = vmatpush2.msra.mxu0 %v1381
        %1603 = vmatprep.subr.mxu0 %v1380
        %1604 = vmatpush2.msra.mxu0 %v1379
        %1605 = vmatprep.subr.mxu0 %v1378
        %1606 = vmatpush2.msra.mxu0 %v1377
        %1607 = vmatprep.subr.mxu0 %v1376
        %1608 = vmatpush2.msra.mxu0 %v1375
        %1609 = vmatprep.subr.mxu0 %v1374
        %1610 = vmatpush2.msra.mxu0 %v1373
        %1611 = vmatprep.mubr.f32.mxu0 %v1210
        %1612 = vmatmul.mubr.f32.gmra.mxu0 %v1207
        %v1613 = vpop.f32.mrf.mxu0
        %v1614 = vadd.f32 %v1543, %v1613
        %v1615 = vpop.f32.mrf.mxu0
        %v1616 = vadd.f32 %v1545, %v1615
        %1617 = vdwg.mxu0
        %v1618 = vld [vmem:[%s11] sm:$0x3]
        %v1620 = vlaneseq
        %v1621 = vshrl.u32 %v1620, 7
        %v1622 = vsub.s32 0, %v1621
        %v1623 = vrot.slane %v1618, %v1622
        %v1624 = vlaneseq
        %v1625 = vshrl.u32 %v1624, 7
        %v1626 = vsub.s32 1, %v1625
        %v1627 = vrot.slane %v1618, %v1626
        %v1630 = vmul.f32 %v1614, %v1623
        %v1631 = vmul.f32 %v1616, %v1627
        %v1632 = vld [vmem:[%s12] sm:$0x3]
        %v1634 = vlaneseq
        %v1635 = vshrl.u32 %v1634, 7
        %v1636 = vsub.s32 0, %v1635
        %v1637 = vrot.slane %v1632, %v1636
        %v1638 = vlaneseq
        %v1639 = vshrl.u32 %v1638, 7
        %v1640 = vsub.s32 1, %v1639
        %v1641 = vrot.slane %v1632, %v1640
        %v1644 = vadd.f32 %v1630, %v1637
        %v1645 = vadd.f32 %v1631, %v1641
        %vm1646 = vcmp.gt.f32.partialorder %v1644, 0.0
        %vm1647 = vcmp.gt.f32.partialorder %v1645, 0.0
        %v1648 = vmul.f32 %v1644, 0.01
        %v1649 = vmul.f32 %v1645, 0.01
        %v1650 = vsel %vm1646, %v1644, %v1648
        %v1651 = vsel %vm1647, %v1645, %v1649
        %v1652 = vld [vmem:[%s13] sm:$0xff]
        %v1653 = vld [vmem:[%s13 + $0x8] sm:$0xff]
        %v1654 = vld [vmem:[%s13 + $0x10] sm:$0xff]
        %v1655 = vld [vmem:[%s13 + $0x18] sm:$0xff]
        %v1656 = vld [vmem:[%s13 + $0x20] sm:$0xff]
        %v1657 = vld [vmem:[%s13 + $0x28] sm:$0xff]
        %v1658 = vld [vmem:[%s13 + $0x30] sm:$0xff]
        %v1659 = vld [vmem:[%s13 + $0x38] sm:$0xff]
        %v1660 = vld [vmem:[%s13 + $0x40] sm:$0xff]
        %v1661 = vld [vmem:[%s13 + $0x48] sm:$0xff]
        %v1662 = vld [vmem:[%s13 + $0x50] sm:$0xff]
        %v1663 = vld [vmem:[%s13 + $0x58] sm:$0xff]
        %v1664 = vld [vmem:[%s13 + $0x60] sm:$0xff]
        %v1665 = vld [vmem:[%s13 + $0x68] sm:$0xff]
        %v1666 = vld [vmem:[%s13 + $0x70] sm:$0xff]
        %v1667 = vld [vmem:[%s13 + $0x78] sm:$0xff]
        %v1668 = vld [vmem:[%s13 + $0x80] sm:$0xff]
        %v1669 = vld [vmem:[%s13 + $0x88] sm:$0xff]
        %v1670 = vld [vmem:[%s13 + $0x90] sm:$0xff]
        %v1671 = vld [vmem:[%s13 + $0x98] sm:$0xff]
        %v1672 = vld [vmem:[%s13 + $0xa0] sm:$0xff]
        %v1673 = vld [vmem:[%s13 + $0xa8] sm:$0xff]
        %v1674 = vld [vmem:[%s13 + $0xb0] sm:$0xff]
        %v1675 = vld [vmem:[%s13 + $0xb8] sm:$0xff]
        %v1676 = vld [vmem:[%s13 + $0xc0] sm:$0xff]
        %v1677 = vld [vmem:[%s13 + $0xc8] sm:$0xff]
        %v1678 = vld [vmem:[%s13 + $0xd0] sm:$0xff]
        %v1679 = vld [vmem:[%s13 + $0xd8] sm:$0xff]
        %v1680 = vld [vmem:[%s13 + $0xe0] sm:$0xff]
        %v1681 = vld [vmem:[%s13 + $0xe8] sm:$0xff]
        %v1682 = vld [vmem:[%s13 + $0xf0] sm:$0xff]
        %v1683 = vld [vmem:[%s13 + $0xf8] sm:$0xff]
        %1684 = vmatprep.subr.mxu0 0.0
        %1685 = vmatpush1.msra.mxu0 %v1667
        %1686 = vmatprep.subr.mxu0 0.0
        %1687 = vmatpush1.msra.mxu0 %v1666
        %1688 = vmatprep.subr.mxu0 0.0
        %1689 = vmatpush1.msra.mxu0 %v1665
        %1690 = vmatprep.subr.mxu0 0.0
        %1691 = vmatpush1.msra.mxu0 %v1664
        %1692 = vmatprep.subr.mxu0 0.0
        %1693 = vmatpush1.msra.mxu0 %v1663
        %1694 = vmatprep.subr.mxu0 0.0
        %1695 = vmatpush1.msra.mxu0 %v1662
        %1696 = vmatprep.subr.mxu0 0.0
        %1697 = vmatpush1.msra.mxu0 %v1661
        %1698 = vmatprep.subr.mxu0 0.0
        %1699 = vmatpush1.msra.mxu0 %v1660
        %1700 = vmatprep.subr.mxu0 0.0
        %1701 = vmatpush1.msra.mxu0 %v1659
        %1702 = vmatprep.subr.mxu0 0.0
        %1703 = vmatpush1.msra.mxu0 %v1658
        %1704 = vmatprep.subr.mxu0 0.0
        %1705 = vmatpush1.msra.mxu0 %v1657
        %1706 = vmatprep.subr.mxu0 0.0
        %1707 = vmatpush1.msra.mxu0 %v1656
        %1708 = vmatprep.subr.mxu0 0.0
        %1709 = vmatpush1.msra.mxu0 %v1655
        %1710 = vmatprep.subr.mxu0 0.0
        %1711 = vmatpush1.msra.mxu0 %v1654
        %1712 = vmatprep.subr.mxu0 0.0
        %1713 = vmatpush1.msra.mxu0 %v1653
        %1714 = vmatprep.subr.mxu0 0.0
        %1715 = vmatpush1.msra.mxu0 %v1652
        %1716 = vmatprep.subr.mxu0 0.0
        %1717 = vmatpush2.msra.mxu0 %v1683
        %1718 = vmatprep.subr.mxu0 0.0
        %1719 = vmatpush2.msra.mxu0 %v1682
        %1720 = vmatprep.subr.mxu0 0.0
        %1721 = vmatpush2.msra.mxu0 %v1681
        %1722 = vmatprep.subr.mxu0 0.0
        %1723 = vmatpush2.msra.mxu0 %v1680
        %1724 = vmatprep.subr.mxu0 0.0
        %1725 = vmatpush2.msra.mxu0 %v1679
        %1726 = vmatprep.subr.mxu0 0.0
        %1727 = vmatpush2.msra.mxu0 %v1678
        %1728 = vmatprep.subr.mxu0 0.0
        %1729 = vmatpush2.msra.mxu0 %v1677
        %1730 = vmatprep.subr.mxu0 0.0
        %1731 = vmatpush2.msra.mxu0 %v1676
        %1732 = vmatprep.subr.mxu0 0.0
        %1733 = vmatpush2.msra.mxu0 %v1675
        %1734 = vmatprep.subr.mxu0 0.0
        %1735 = vmatpush2.msra.mxu0 %v1674
        %1736 = vmatprep.subr.mxu0 0.0
        %1737 = vmatpush2.msra.mxu0 %v1673
        %1738 = vmatprep.subr.mxu0 0.0
        %1739 = vmatpush2.msra.mxu0 %v1672
        %1740 = vmatprep.subr.mxu0 0.0
        %1741 = vmatpush2.msra.mxu0 %v1671
        %1742 = vmatprep.subr.mxu0 0.0
        %1743 = vmatpush2.msra.mxu0 %v1670
        %1744 = vmatprep.subr.mxu0 0.0
        %1745 = vmatpush2.msra.mxu0 %v1669
        %1746 = vmatprep.subr.mxu0 0.0
        %1747 = vmatpush2.msra.mxu0 %v1668
        %1748 = vmatprep.mubr.f32.mxu0 %v1651
        %1749 = vmatmul.mubr.f32.gmra.mxu0 %v1650
        %v1750 = vpop.f32.mrf.mxu0
        %v1751 = vadd.f32 0.0, %v1750
        %v1752 = vpop.f32.mrf.mxu0
        %1753 = vdwg.mxu0
        %v1754 = vld [vmem:[%s14] sm:$0x1]
        %v1756 = vlaneseq
        %v1757 = vshrl.u32 %v1756, 7
        %v1758 = vsub.s32 0, %v1757
        %v1759 = vrot.slane %v1754, %v1758
        %v1761 = vmul.f32 %v1751, %v1759
        %v1762 = vld [vmem:[%s15] sm:$0x1]
        %v1764 = vlaneseq
        %v1765 = vshrl.u32 %v1764, 7
        %v1766 = vsub.s32 0, %v1765
        %v1767 = vrot.slane %v1762, %v1766
        %v1769 = vadd.f32 %v1761, %v1767
        %vm1770 = vcmp.gt.f32.partialorder %v1769, 0.0
        %v1771 = vmul.f32 %v1769, 0.01
        %v1772 = vsel %vm1770, %v1769, %v1771
        %v1774 = vrot.slane %v1772, 1
        %v1776 = vrot.slane %v1772, 2
        %v1778 = vrot.slane %v1772, 3
        %v1780 = vrot.slane %v1772, 4
        %v1782 = vrot.slane %v1772, 5
        %v1784 = vrot.slane %v1772, 6
        %v1786 = vrot.slane %v1772, 7
        %v1788 = vld [vmem:[%s16] sm:$0xff]
        %v1789 = vld [vmem:[%s16 + $0x8] sm:$0xff]
        %v1790 = vld [vmem:[%s16 + $0x10] sm:$0xff]
        %v1791 = vld [vmem:[%s16 + $0x18] sm:$0xff]
        %v1792 = vld [vmem:[%s16 + $0x20] sm:$0xff]
        %v1793 = vld [vmem:[%s16 + $0x28] sm:$0xff]
        %v1794 = vld [vmem:[%s16 + $0x30] sm:$0xff]
        %v1795 = vld [vmem:[%s16 + $0x38] sm:$0xff]
        %v1796 = vld [vmem:[%s16 + $0x40] sm:$0xff]
        %v1797 = vld [vmem:[%s16 + $0x48] sm:$0xff]
        %v1798 = vld [vmem:[%s16 + $0x50] sm:$0xff]
        %v1799 = vld [vmem:[%s16 + $0x58] sm:$0xff]
        %v1800 = vld [vmem:[%s16 + $0x60] sm:$0xff]
        %v1801 = vld [vmem:[%s16 + $0x68] sm:$0xff]
        %v1802 = vld [vmem:[%s16 + $0x70] sm:$0xff]
        %v1803 = vld [vmem:[%s16 + $0x78] sm:$0xff]
        %v1804 = vld [vmem:[%s16 + $0x80] sm:$0xff]
        %v1805 = vld [vmem:[%s16 + $0x88] sm:$0xff]
        %v1806 = vld [vmem:[%s16 + $0x90] sm:$0xff]
        %v1807 = vld [vmem:[%s16 + $0x98] sm:$0xff]
        %v1808 = vld [vmem:[%s16 + $0xa0] sm:$0xff]
        %v1809 = vld [vmem:[%s16 + $0xa8] sm:$0xff]
        %v1810 = vld [vmem:[%s16 + $0xb0] sm:$0xff]
        %v1811 = vld [vmem:[%s16 + $0xb8] sm:$0xff]
        %v1812 = vld [vmem:[%s16 + $0xc0] sm:$0xff]
        %v1813 = vld [vmem:[%s16 + $0xc8] sm:$0xff]
        %v1814 = vld [vmem:[%s16 + $0xd0] sm:$0xff]
        %v1815 = vld [vmem:[%s16 + $0xd8] sm:$0xff]
        %v1816 = vld [vmem:[%s16 + $0xe0] sm:$0xff]
        %v1817 = vld [vmem:[%s16 + $0xe8] sm:$0xff]
        %v1818 = vld [vmem:[%s16 + $0xf0] sm:$0xff]
        %v1819 = vld [vmem:[%s16 + $0xf8] sm:$0xff]
        %v1820 = vld [vmem:[%s16 + $0x100] sm:$0xff]
        %v1821 = vld [vmem:[%s16 + $0x108] sm:$0xff]
        %v1822 = vld [vmem:[%s16 + $0x110] sm:$0xff]
        %v1823 = vld [vmem:[%s16 + $0x118] sm:$0xff]
        %v1824 = vld [vmem:[%s16 + $0x120] sm:$0xff]
        %v1825 = vld [vmem:[%s16 + $0x128] sm:$0xff]
        %v1826 = vld [vmem:[%s16 + $0x130] sm:$0xff]
        %v1827 = vld [vmem:[%s16 + $0x138] sm:$0xff]
        %v1828 = vld [vmem:[%s16 + $0x140] sm:$0xff]
        %v1829 = vld [vmem:[%s16 + $0x148] sm:$0xff]
        %v1830 = vld [vmem:[%s16 + $0x150] sm:$0xff]
        %v1831 = vld [vmem:[%s16 + $0x158] sm:$0xff]
        %v1832 = vld [vmem:[%s16 + $0x160] sm:$0xff]
        %v1833 = vld [vmem:[%s16 + $0x168] sm:$0xff]
        %v1834 = vld [vmem:[%s16 + $0x170] sm:$0xff]
        %v1835 = vld [vmem:[%s16 + $0x178] sm:$0xff]
        %v1836 = vld [vmem:[%s16 + $0x180] sm:$0xff]
        %v1837 = vld [vmem:[%s16 + $0x188] sm:$0xff]
        %v1838 = vld [vmem:[%s16 + $0x190] sm:$0xff]
        %v1839 = vld [vmem:[%s16 + $0x198] sm:$0xff]
        %v1840 = vld [vmem:[%s16 + $0x1a0] sm:$0xff]
        %v1841 = vld [vmem:[%s16 + $0x1a8] sm:$0xff]
        %v1842 = vld [vmem:[%s16 + $0x1b0] sm:$0xff]
        %v1843 = vld [vmem:[%s16 + $0x1b8] sm:$0xff]
        %v1844 = vld [vmem:[%s16 + $0x1c0] sm:$0xff]
        %v1845 = vld [vmem:[%s16 + $0x1c8] sm:$0xff]
        %v1846 = vld [vmem:[%s16 + $0x1d0] sm:$0xff]
        %v1847 = vld [vmem:[%s16 + $0x1d8] sm:$0xff]
        %v1848 = vld [vmem:[%s16 + $0x1e0] sm:$0xff]
        %v1849 = vld [vmem:[%s16 + $0x1e8] sm:$0xff]
        %v1850 = vld [vmem:[%s16 + $0x1f0] sm:$0xff]
        %v1851 = vld [vmem:[%s16 + $0x1f8] sm:$0xff]
        %v1852 = vld [vmem:[%s16 + $0x200] sm:$0xff]
        %v1853 = vld [vmem:[%s16 + $0x208] sm:$0xff]
        %v1854 = vld [vmem:[%s16 + $0x210] sm:$0xff]
        %v1855 = vld [vmem:[%s16 + $0x218] sm:$0xff]
        %v1856 = vld [vmem:[%s16 + $0x220] sm:$0xff]
        %v1857 = vld [vmem:[%s16 + $0x228] sm:$0xff]
        %v1858 = vld [vmem:[%s16 + $0x230] sm:$0xff]
        %v1859 = vld [vmem:[%s16 + $0x238] sm:$0xff]
        %v1860 = vld [vmem:[%s16 + $0x240] sm:$0xff]
        %v1861 = vld [vmem:[%s16 + $0x248] sm:$0xff]
        %v1862 = vld [vmem:[%s16 + $0x250] sm:$0xff]
        %v1863 = vld [vmem:[%s16 + $0x258] sm:$0xff]
        %v1864 = vld [vmem:[%s16 + $0x260] sm:$0xff]
        %v1865 = vld [vmem:[%s16 + $0x268] sm:$0xff]
        %v1866 = vld [vmem:[%s16 + $0x270] sm:$0xff]
        %v1867 = vld [vmem:[%s16 + $0x278] sm:$0xff]
        %v1868 = vld [vmem:[%s16 + $0x280] sm:$0xff]
        %v1869 = vld [vmem:[%s16 + $0x288] sm:$0xff]
        %v1870 = vld [vmem:[%s16 + $0x290] sm:$0xff]
        %v1871 = vld [vmem:[%s16 + $0x298] sm:$0xff]
        %v1872 = vld [vmem:[%s16 + $0x2a0] sm:$0xff]
        %v1873 = vld [vmem:[%s16 + $0x2a8] sm:$0xff]
        %v1874 = vld [vmem:[%s16 + $0x2b0] sm:$0xff]
        %v1875 = vld [vmem:[%s16 + $0x2b8] sm:$0xff]
        %v1876 = vld [vmem:[%s16 + $0x2c0] sm:$0xff]
        %v1877 = vld [vmem:[%s16 + $0x2c8] sm:$0xff]
        %v1878 = vld [vmem:[%s16 + $0x2d0] sm:$0xff]
        %v1879 = vld [vmem:[%s16 + $0x2d8] sm:$0xff]
        %v1880 = vld [vmem:[%s16 + $0x2e0] sm:$0xff]
        %v1881 = vld [vmem:[%s16 + $0x2e8] sm:$0xff]
        %v1882 = vld [vmem:[%s16 + $0x2f0] sm:$0xff]
        %v1883 = vld [vmem:[%s16 + $0x2f8] sm:$0xff]
        %v1884 = vld [vmem:[%s16 + $0x300] sm:$0xff]
        %v1885 = vld [vmem:[%s16 + $0x308] sm:$0xff]
        %v1886 = vld [vmem:[%s16 + $0x310] sm:$0xff]
        %v1887 = vld [vmem:[%s16 + $0x318] sm:$0xff]
        %v1888 = vld [vmem:[%s16 + $0x320] sm:$0xff]
        %v1889 = vld [vmem:[%s16 + $0x328] sm:$0xff]
        %v1890 = vld [vmem:[%s16 + $0x330] sm:$0xff]
        %v1891 = vld [vmem:[%s16 + $0x338] sm:$0xff]
        %v1892 = vld [vmem:[%s16 + $0x340] sm:$0xff]
        %v1893 = vld [vmem:[%s16 + $0x348] sm:$0xff]
        %v1894 = vld [vmem:[%s16 + $0x350] sm:$0xff]
        %v1895 = vld [vmem:[%s16 + $0x358] sm:$0xff]
        %v1896 = vld [vmem:[%s16 + $0x360] sm:$0xff]
        %v1897 = vld [vmem:[%s16 + $0x368] sm:$0xff]
        %v1898 = vld [vmem:[%s16 + $0x370] sm:$0xff]
        %v1899 = vld [vmem:[%s16 + $0x378] sm:$0xff]
        %v1900 = vld [vmem:[%s16 + $0x380] sm:$0xff]
        %v1901 = vld [vmem:[%s16 + $0x388] sm:$0xff]
        %v1902 = vld [vmem:[%s16 + $0x390] sm:$0xff]
        %v1903 = vld [vmem:[%s16 + $0x398] sm:$0xff]
        %v1904 = vld [vmem:[%s16 + $0x3a0] sm:$0xff]
        %v1905 = vld [vmem:[%s16 + $0x3a8] sm:$0xff]
        %v1906 = vld [vmem:[%s16 + $0x3b0] sm:$0xff]
        %v1907 = vld [vmem:[%s16 + $0x3b8] sm:$0xff]
        %v1908 = vld [vmem:[%s16 + $0x3c0] sm:$0xff]
        %v1909 = vld [vmem:[%s16 + $0x3c8] sm:$0xff]
        %v1910 = vld [vmem:[%s16 + $0x3d0] sm:$0xff]
        %v1911 = vld [vmem:[%s16 + $0x3d8] sm:$0xff]
        %v1912 = vld [vmem:[%s16 + $0x3e0] sm:$0xff]
        %v1913 = vld [vmem:[%s16 + $0x3e8] sm:$0xff]
        %v1914 = vld [vmem:[%s16 + $0x3f0] sm:$0xff]
        %v1915 = vld [vmem:[%s16 + $0x3f8] sm:$0xff]
        %v1916 = vld [vmem:[%s17] sm:$0x1]
        %1917 = vmatprep.subr.mxu0 0.0
        %1918 = vmatpush1.msra.mxu0 %v1803
        %1919 = vmatprep.subr.mxu0 0.0
        %1920 = vmatpush1.msra.mxu0 %v1802
        %1921 = vmatprep.subr.mxu0 0.0
        %1922 = vmatpush1.msra.mxu0 %v1801
        %1923 = vmatprep.subr.mxu0 0.0
        %1924 = vmatpush1.msra.mxu0 %v1800
        %1925 = vmatprep.subr.mxu0 0.0
        %1926 = vmatpush1.msra.mxu0 %v1799
        %1927 = vmatprep.subr.mxu0 0.0
        %1928 = vmatpush1.msra.mxu0 %v1798
        %1929 = vmatprep.subr.mxu0 0.0
        %1930 = vmatpush1.msra.mxu0 %v1797
        %1931 = vmatprep.subr.mxu0 0.0
        %1932 = vmatpush1.msra.mxu0 %v1796
        %1933 = vmatprep.subr.mxu0 0.0
        %1934 = vmatpush1.msra.mxu0 %v1795
        %1935 = vmatprep.subr.mxu0 0.0
        %1936 = vmatpush1.msra.mxu0 %v1794
        %1937 = vmatprep.subr.mxu0 0.0
        %1938 = vmatpush1.msra.mxu0 %v1793
        %1939 = vmatprep.subr.mxu0 0.0
        %1940 = vmatpush1.msra.mxu0 %v1792
        %1941 = vmatprep.subr.mxu0 0.0
        %1942 = vmatpush1.msra.mxu0 %v1791
        %1943 = vmatprep.subr.mxu0 0.0
        %1944 = vmatpush1.msra.mxu0 %v1790
        %1945 = vmatprep.subr.mxu0 0.0
        %1946 = vmatpush1.msra.mxu0 %v1789
        %1947 = vmatprep.subr.mxu0 0.0
        %1948 = vmatpush1.msra.mxu0 %v1788
        %1949 = vmatprep.subr.mxu0 0.0
        %1950 = vmatpush2.msra.mxu0 %v1819
        %1951 = vmatprep.subr.mxu0 0.0
        %1952 = vmatpush2.msra.mxu0 %v1818
        %1953 = vmatprep.subr.mxu0 0.0
        %1954 = vmatpush2.msra.mxu0 %v1817
        %1955 = vmatprep.subr.mxu0 0.0
        %1956 = vmatpush2.msra.mxu0 %v1816
        %1957 = vmatprep.subr.mxu0 0.0
        %1958 = vmatpush2.msra.mxu0 %v1815
        %1959 = vmatprep.subr.mxu0 0.0
        %1960 = vmatpush2.msra.mxu0 %v1814
        %1961 = vmatprep.subr.mxu0 0.0
        %1962 = vmatpush2.msra.mxu0 %v1813
        %1963 = vmatprep.subr.mxu0 0.0
        %1964 = vmatpush2.msra.mxu0 %v1812
        %1965 = vmatprep.subr.mxu0 0.0
        %1966 = vmatpush2.msra.mxu0 %v1811
        %1967 = vmatprep.subr.mxu0 0.0
        %1968 = vmatpush2.msra.mxu0 %v1810
        %1969 = vmatprep.subr.mxu0 0.0
        %1970 = vmatpush2.msra.mxu0 %v1809
        %1971 = vmatprep.subr.mxu0 0.0
        %1972 = vmatpush2.msra.mxu0 %v1808
        %1973 = vmatprep.subr.mxu0 0.0
        %1974 = vmatpush2.msra.mxu0 %v1807
        %1975 = vmatprep.subr.mxu0 0.0
        %1976 = vmatpush2.msra.mxu0 %v1806
        %1977 = vmatprep.subr.mxu0 0.0
        %1978 = vmatpush2.msra.mxu0 %v1805
        %1979 = vmatprep.subr.mxu0 0.0
        %1980 = vmatpush2.msra.mxu0 %v1804
        %1981 = vmatprep.mubr.f32.mxu0 %v1774
        %1982 = vmatmul.mubr.f32.gmra.mxu0 %v1772
        %v1983 = vpop.f32.mrf.mxu0
        %v1984 = vadd.f32 %v1916, %v1983
        %v1985 = vpop.f32.mrf.mxu0
        %1986 = vdwg.mxu0
        %1987 = vmatprep.subr.mxu0 0.0
        %1988 = vmatpush1.msra.mxu0 %v1835
        %1989 = vmatprep.subr.mxu0 0.0
        %1990 = vmatpush1.msra.mxu0 %v1834
        %1991 = vmatprep.subr.mxu0 0.0
        %1992 = vmatpush1.msra.mxu0 %v1833
        %1993 = vmatprep.subr.mxu0 0.0
        %1994 = vmatpush1.msra.mxu0 %v1832
        %1995 = vmatprep.subr.mxu0 0.0
        %1996 = vmatpush1.msra.mxu0 %v1831
        %1997 = vmatprep.subr.mxu0 0.0
        %1998 = vmatpush1.msra.mxu0 %v1830
        %1999 = vmatprep.subr.mxu0 0.0
        %2000 = vmatpush1.msra.mxu0 %v1829
        %2001 = vmatprep.subr.mxu0 0.0
        %2002 = vmatpush1.msra.mxu0 %v1828
        %2003 = vmatprep.subr.mxu0 0.0
        %2004 = vmatpush1.msra.mxu0 %v1827
        %2005 = vmatprep.subr.mxu0 0.0
        %2006 = vmatpush1.msra.mxu0 %v1826
        %2007 = vmatprep.subr.mxu0 0.0
        %2008 = vmatpush1.msra.mxu0 %v1825
        %2009 = vmatprep.subr.mxu0 0.0
        %2010 = vmatpush1.msra.mxu0 %v1824
        %2011 = vmatprep.subr.mxu0 0.0
        %2012 = vmatpush1.msra.mxu0 %v1823
        %2013 = vmatprep.subr.mxu0 0.0
        %2014 = vmatpush1.msra.mxu0 %v1822
        %2015 = vmatprep.subr.mxu0 0.0
        %2016 = vmatpush1.msra.mxu0 %v1821
        %2017 = vmatprep.subr.mxu0 0.0
        %2018 = vmatpush1.msra.mxu0 %v1820
        %2019 = vmatprep.subr.mxu0 0.0
        %2020 = vmatpush2.msra.mxu0 %v1851
        %2021 = vmatprep.subr.mxu0 0.0
        %2022 = vmatpush2.msra.mxu0 %v1850
        %2023 = vmatprep.subr.mxu0 0.0
        %2024 = vmatpush2.msra.mxu0 %v1849
        %2025 = vmatprep.subr.mxu0 0.0
        %2026 = vmatpush2.msra.mxu0 %v1848
        %2027 = vmatprep.subr.mxu0 0.0
        %2028 = vmatpush2.msra.mxu0 %v1847
        %2029 = vmatprep.subr.mxu0 0.0
        %2030 = vmatpush2.msra.mxu0 %v1846
        %2031 = vmatprep.subr.mxu0 0.0
        %2032 = vmatpush2.msra.mxu0 %v1845
        %2033 = vmatprep.subr.mxu0 0.0
        %2034 = vmatpush2.msra.mxu0 %v1844
        %2035 = vmatprep.subr.mxu0 0.0
        %2036 = vmatpush2.msra.mxu0 %v1843
        %2037 = vmatprep.subr.mxu0 0.0
        %2038 = vmatpush2.msra.mxu0 %v1842
        %2039 = vmatprep.subr.mxu0 0.0
        %2040 = vmatpush2.msra.mxu0 %v1841
        %2041 = vmatprep.subr.mxu0 0.0
        %2042 = vmatpush2.msra.mxu0 %v1840
        %2043 = vmatprep.subr.mxu0 0.0
        %2044 = vmatpush2.msra.mxu0 %v1839
        %2045 = vmatprep.subr.mxu0 0.0
        %2046 = vmatpush2.msra.mxu0 %v1838
        %2047 = vmatprep.subr.mxu0 0.0
        %2048 = vmatpush2.msra.mxu0 %v1837
        %2049 = vmatprep.subr.mxu0 0.0
        %2050 = vmatpush2.msra.mxu0 %v1836
        %2051 = vmatprep.mubr.f32.mxu0 %v1778
        %2052 = vmatmul.mubr.f32.gmra.mxu0 %v1776
        %v2053 = vpop.f32.mrf.mxu0
        %v2054 = vadd.f32 %v1984, %v2053
        %v2055 = vpop.f32.mrf.mxu0
        %2056 = vdwg.mxu0
        %2057 = vmatprep.subr.mxu0 0.0
        %2058 = vmatpush1.msra.mxu0 %v1867
        %2059 = vmatprep.subr.mxu0 0.0
        %2060 = vmatpush1.msra.mxu0 %v1866
        %2061 = vmatprep.subr.mxu0 0.0
        %2062 = vmatpush1.msra.mxu0 %v1865
        %2063 = vmatprep.subr.mxu0 0.0
        %2064 = vmatpush1.msra.mxu0 %v1864
        %2065 = vmatprep.subr.mxu0 0.0
        %2066 = vmatpush1.msra.mxu0 %v1863
        %2067 = vmatprep.subr.mxu0 0.0
        %2068 = vmatpush1.msra.mxu0 %v1862
        %2069 = vmatprep.subr.mxu0 0.0
        %2070 = vmatpush1.msra.mxu0 %v1861
        %2071 = vmatprep.subr.mxu0 0.0
        %2072 = vmatpush1.msra.mxu0 %v1860
        %2073 = vmatprep.subr.mxu0 0.0
        %2074 = vmatpush1.msra.mxu0 %v1859
        %2075 = vmatprep.subr.mxu0 0.0
        %2076 = vmatpush1.msra.mxu0 %v1858
        %2077 = vmatprep.subr.mxu0 0.0
        %2078 = vmatpush1.msra.mxu0 %v1857
        %2079 = vmatprep.subr.mxu0 0.0
        %2080 = vmatpush1.msra.mxu0 %v1856
        %2081 = vmatprep.subr.mxu0 0.0
        %2082 = vmatpush1.msra.mxu0 %v1855
        %2083 = vmatprep.subr.mxu0 0.0
        %2084 = vmatpush1.msra.mxu0 %v1854
        %2085 = vmatprep.subr.mxu0 0.0
        %2086 = vmatpush1.msra.mxu0 %v1853
        %2087 = vmatprep.subr.mxu0 0.0
        %2088 = vmatpush1.msra.mxu0 %v1852
        %2089 = vmatprep.subr.mxu0 0.0
        %2090 = vmatpush2.msra.mxu0 %v1883
        %2091 = vmatprep.subr.mxu0 0.0
        %2092 = vmatpush2.msra.mxu0 %v1882
        %2093 = vmatprep.subr.mxu0 0.0
        %2094 = vmatpush2.msra.mxu0 %v1881
        %2095 = vmatprep.subr.mxu0 0.0
        %2096 = vmatpush2.msra.mxu0 %v1880
        %2097 = vmatprep.subr.mxu0 0.0
        %2098 = vmatpush2.msra.mxu0 %v1879
        %2099 = vmatprep.subr.mxu0 0.0
        %2100 = vmatpush2.msra.mxu0 %v1878
        %2101 = vmatprep.subr.mxu0 0.0
        %2102 = vmatpush2.msra.mxu0 %v1877
        %2103 = vmatprep.subr.mxu0 0.0
        %2104 = vmatpush2.msra.mxu0 %v1876
        %2105 = vmatprep.subr.mxu0 0.0
        %2106 = vmatpush2.msra.mxu0 %v1875
        %2107 = vmatprep.subr.mxu0 0.0
        %2108 = vmatpush2.msra.mxu0 %v1874
        %2109 = vmatprep.subr.mxu0 0.0
        %2110 = vmatpush2.msra.mxu0 %v1873
        %2111 = vmatprep.subr.mxu0 0.0
        %2112 = vmatpush2.msra.mxu0 %v1872
        %2113 = vmatprep.subr.mxu0 0.0
        %2114 = vmatpush2.msra.mxu0 %v1871
        %2115 = vmatprep.subr.mxu0 0.0
        %2116 = vmatpush2.msra.mxu0 %v1870
        %2117 = vmatprep.subr.mxu0 0.0
        %2118 = vmatpush2.msra.mxu0 %v1869
        %2119 = vmatprep.subr.mxu0 0.0
        %2120 = vmatpush2.msra.mxu0 %v1868
        %2121 = vmatprep.mubr.f32.mxu0 %v1782
        %2122 = vmatmul.mubr.f32.gmra.mxu0 %v1780
        %v2123 = vpop.f32.mrf.mxu0
        %v2124 = vadd.f32 %v2054, %v2123
        %v2125 = vpop.f32.mrf.mxu0
        %2126 = vdwg.mxu0
        %2127 = vmatprep.subr.mxu0 0.0
        %2128 = vmatpush1.msra.mxu0 %v1899
        %2129 = vmatprep.subr.mxu0 0.0
        %2130 = vmatpush1.msra.mxu0 %v1898
        %2131 = vmatprep.subr.mxu0 0.0
        %2132 = vmatpush1.msra.mxu0 %v1897
        %2133 = vmatprep.subr.mxu0 0.0
        %2134 = vmatpush1.msra.mxu0 %v1896
        %2135 = vmatprep.subr.mxu0 0.0
        %2136 = vmatpush1.msra.mxu0 %v1895
        %2137 = vmatprep.subr.mxu0 0.0
        %2138 = vmatpush1.msra.mxu0 %v1894
        %2139 = vmatprep.subr.mxu0 0.0
        %2140 = vmatpush1.msra.mxu0 %v1893
        %2141 = vmatprep.subr.mxu0 0.0
        %2142 = vmatpush1.msra.mxu0 %v1892
        %2143 = vmatprep.subr.mxu0 0.0
        %2144 = vmatpush1.msra.mxu0 %v1891
        %2145 = vmatprep.subr.mxu0 0.0
        %2146 = vmatpush1.msra.mxu0 %v1890
        %2147 = vmatprep.subr.mxu0 0.0
        %2148 = vmatpush1.msra.mxu0 %v1889
        %2149 = vmatprep.subr.mxu0 0.0
        %2150 = vmatpush1.msra.mxu0 %v1888
        %2151 = vmatprep.subr.mxu0 0.0
        %2152 = vmatpush1.msra.mxu0 %v1887
        %2153 = vmatprep.subr.mxu0 0.0
        %2154 = vmatpush1.msra.mxu0 %v1886
        %2155 = vmatprep.subr.mxu0 0.0
        %2156 = vmatpush1.msra.mxu0 %v1885
        %2157 = vmatprep.subr.mxu0 0.0
        %2158 = vmatpush1.msra.mxu0 %v1884
        %2159 = vmatprep.subr.mxu0 0.0
        %2160 = vmatpush2.msra.mxu0 %v1915
        %2161 = vmatprep.subr.mxu0 0.0
        %2162 = vmatpush2.msra.mxu0 %v1914
        %2163 = vmatprep.subr.mxu0 0.0
        %2164 = vmatpush2.msra.mxu0 %v1913
        %2165 = vmatprep.subr.mxu0 0.0
        %2166 = vmatpush2.msra.mxu0 %v1912
        %2167 = vmatprep.subr.mxu0 0.0
        %2168 = vmatpush2.msra.mxu0 %v1911
        %2169 = vmatprep.subr.mxu0 0.0
        %2170 = vmatpush2.msra.mxu0 %v1910
        %2171 = vmatprep.subr.mxu0 0.0
        %2172 = vmatpush2.msra.mxu0 %v1909
        %2173 = vmatprep.subr.mxu0 0.0
        %2174 = vmatpush2.msra.mxu0 %v1908
        %2175 = vmatprep.subr.mxu0 0.0
        %2176 = vmatpush2.msra.mxu0 %v1907
        %2177 = vmatprep.subr.mxu0 0.0
        %2178 = vmatpush2.msra.mxu0 %v1906
        %2179 = vmatprep.subr.mxu0 0.0
        %2180 = vmatpush2.msra.mxu0 %v1905
        %2181 = vmatprep.subr.mxu0 0.0
        %2182 = vmatpush2.msra.mxu0 %v1904
        %2183 = vmatprep.subr.mxu0 0.0
        %2184 = vmatpush2.msra.mxu0 %v1903
        %2185 = vmatprep.subr.mxu0 0.0
        %2186 = vmatpush2.msra.mxu0 %v1902
        %2187 = vmatprep.subr.mxu0 0.0
        %2188 = vmatpush2.msra.mxu0 %v1901
        %2189 = vmatprep.subr.mxu0 0.0
        %2190 = vmatpush2.msra.mxu0 %v1900
        %2191 = vmatprep.mubr.f32.mxu0 %v1786
        %2192 = vmatmul.mubr.f32.gmra.mxu0 %v1784
        %v2193 = vpop.f32.mrf.mxu0
        %v2194 = vadd.f32 %v2124, %v2193
        %v2195 = vpop.f32.mrf.mxu0
        %2196 = vdwg.mxu0
        %v2197 = vtanh.pop %v2194
        %vm2198 = vcmask 253952
        %2199 = vst.msk [vmem:[%s582] sm:$0x1] %vm2198, %v2197
        %s2200 = sand.u32 %s424, 1
        %s2201 = scalar_lea.sflag [#allocation9], %s2200
        %s2202 = sand.u32 %s424, 1
        %s2203 = scalar_lea.vmem [#allocation10], %s2202
        // Predicated region
        $region97: #{forward.1} parent=91 // pred_check
          %p2204 = pneg %p434
        $region98: #{forward.1} parent=91 // pred_check_branch
          %2206 = sbr.rel (%p2204) target = $region100
        $region99: #{forward.1} parent=91 // pred_region
          %s2208 = ssub.s32 16, 16
          %2209 = vsyncadd %s2201, %s2208
          %s2210 = smul.addr %s33, 16
          %s2211 = scalar_lea.hbm %s18, %s2210
          %s2213 = sshll.u32 %s2203, 4
          %s2214 = int_to_ptr.vmem [resolvable:$true] %s2213
          %2216 = dma.vmem_to_hbm [thread:$0]  %s2214, 16, %s2211, %s2201
        $region100: #{forward.1} parent=91 // pred_fallthru
          _
      $region92: #{forward.1} parent=5 // pred_fallthru
        _
      %p2217 = scmp.le.s32.totalorder 2, %s28
      // Predicated region
      $region101: #{forward.1} parent=5 // pred_check
        %p2218 = pneg %p2217
      $region102: #{forward.1} parent=5 // pred_check_branch
        %2220 = sbr.rel (%p2218) target = $region104
      $region103: #{forward.1} parent=5 // pred_region
        %s2221 = ssub.s32 %s28, 2
        // Predicated region
        $region105: #{forward.1} parent=103 // pred_check
          %p2222 = pneg %p440
        $region106: #{forward.1} parent=103 // pred_check_branch
          %2224 = sbr.rel (%p2222) target = $region108
        $region107: #{forward.1} parent=103 // pred_region
          %s2225 = sand.u32 %s425, 1
          %s2226 = scalar_lea.sflag [#allocation9], %s2225
          %s2227 = sand.u32 %s425, 1
          %s2228 = scalar_lea.vmem [#allocation10], %s2227
          %2229 = dma.done %s2226, 16
        $region108: #{forward.1} parent=103 // pred_fallthru
          _
      $region104: #{forward.1} parent=5 // pred_fallthru
        _
    $region6: #{forward.1} parent=1 // loop_footer
      %s32 = sadd.s32 1, %s28
    $region7: #{forward.1} parent=1 // loop_footer_branch
      %27 = sbr.rel target = $region3
    $region8: #{forward.1} parent=1 // loop_exit
      _
    %2230 = vsyncpa [#allocation8], 1
    %s2231 = scalar_lea.sflag [#allocation8], 1
    %2232 = vsyncpa %s2231, 1
    %2233 = vsyncpa [#allocation9], 1
    %s2234 = scalar_lea.sflag [#allocation9], 1
    %2235 = vsyncpa %s2234, 1

</llo_original>
